<compile_context>
chip_gen: v6e
topology: v6e:2x2x1
jax: 0.10.0
libtpu: 0.0.40
codegen_flags: <defaults>
</compile_context>

<pallas_src>
import jax
import jax.numpy as jnp
from jax import lax
from jax.experimental import pallas as pl
from jax.experimental.pallas import tpu as pltpu

HIDDEN = 32  # fixed by the PyTorch module


def _interleave_gates(g_f, g_b, H):
    """g_f, g_b: (..., 4H) columns in PyTorch gate order [i, f, g, o].

    Returns (..., 8H) columns ordered [i_f, i_b, f_f, f_b, o_f, o_b, g_f, g_b]
    (all sigmoid gates first, tanh gate last; directions interleaved per gate).
    """
    i_f, f_f, gg_f, o_f = (g_f[..., k * H:(k + 1) * H] for k in range(4))
    i_b, f_b, gg_b, o_b = (g_b[..., k * H:(k + 1) * H] for k in range(4))
    return jnp.concatenate([i_f, i_b, f_f, f_b, o_f, o_b, gg_f, gg_b], axis=-1)


def _lstm_clog_kernel(
    x_ref,      # (T*B, 2C)   time-major [x(t) | x(T-1-t)] flattened input
    wih_ref,    # (2C, 8H)    block-diagonal combined W_ih^T (fwd rows 0:C, bwd rows C:2C)
    whh_ref,    # (2H, 8H)    block-diagonal interleaved W_hh^T (both directions)
    b_ref,      # (1, 8H)     combined b_ih + b_hh (both directions)
    wfc_ref,    # (T, 2H, O)  fc weight, per fused-step slabs [fwd(t) ; bwd(T-1-t)]
    bfc_ref,    # (1, O)      fc bias
    out_ref,    # (B, O)
    xw_scr,     # VMEM (T, B, 8H) scratch: merged per-step gate activations
):
    T, B, G = xw_scr.shape
    H2 = whh_ref.shape[0]          # 2H  (stacked fwd|bwd hidden width)
    O = out_ref.shape[1]

    # ---- prologue: input projection for both directions & all fused steps, ONE matmul.
    # Row s*B+b already holds fwd gate cols from x[b, s] and bwd gate cols from x[b, T-1-s],
    # so no per-step direction select is needed in the recurrence.
    xw = jnp.dot(x_ref[...], wih_ref[...], preferred_element_type=jnp.float32) + b_ref[...]
    for s in range(T):
        xw_scr[s] = xw[s * B:(s + 1) * B, :]     # unaligned slicing done once, off the chain

    # ---- hoisted loop-invariant load
    whh = whh_ref[...]                           # (2H, 8H)

    h = jnp.zeros((B, H2), jnp.float32)          # [h_fwd | h_bwd]
    c = jnp.zeros((B, H2), jnp.float32)
    hs = []

    # ---- fused fwd/bwd recurrence, fully unrolled (T small & static).
    # Only chain-critical work in here: one MXU op (same RHS every step), EUP, VPU.
    for s in range(T):
        if s == 0:
            gates = xw_scr[0]                    # h0 == 0: skip the matmul entirely
        else:
            gates = xw_scr[s] + jnp.dot(h, whh, preferred_element_type=jnp.float32)

        sg = jax.nn.sigmoid(gates[:, :3 * H2])   # [i | f | o], both dirs
        gg = jnp.tanh(gates[:, 3 * H2:])         # [g], both dirs
        i_g = sg[:, 0:H2]
        f_g = sg[:, H2:2 * H2]
        o_g = sg[:, 2 * H2:3 * H2]

        c = f_g * c + i_g * gg
        h = o_g * jnp.tanh(c)
        hs.append(h)                             # deferred FC (8 vregs held)

    # ---- epilogue: FC over all steps, completely off the recurrent chain.
    acc = jnp.zeros((B, O), jnp.float32)
    for s in range(T):
        acc = acc + jnp.dot(hs[s], wfc_ref[s], preferred_element_type=jnp.float32)
    out_ref[...] = (acc + bfc_ref[...]).astype(out_ref.dtype)


def lstm_clog_forward(x, params):
    """x: (batch, seq, channels) float32 -> (batch, out_classes) float32."""
    B, T, C = x.shape
    H = HIDDEN
    O = params["b_fc"].shape[0]

    # time-major, each row carries both the forward-time and reversed-time sample so the
    # block-diagonal W_ih produces already-merged fwd/bwd gate activations in one matmul.
    xt = jnp.transpose(x, (1, 0, 2)).astype(jnp.float32)            # (T, B, C)
    x_comb = jnp.concatenate([xt, xt[::-1]], axis=-1).reshape(T * B, 2 * C)   # (T*B, 2C)

    # combined, gate-reordered weights (directions interleaved per gate block)
    zC = jnp.zeros((C, 4 * H), jnp.float32)
    wih_cat = jnp.concatenate(
        [_interleave_gates(params["w_ih_f"].T, zC, H),   # rows 0:C  -> fwd gate cols only
         _interleave_gates(zC, params["w_ih_b"].T, H)],  # rows C:2C -> bwd gate cols only
        axis=0)                                                                # (2C, 8H)
    b_cat = _interleave_gates((params["b_ih_f"] + params["b_hh_f"])[None, :],
                              (params["b_ih_b"] + params["b_hh_b"])[None, :], H)  # (1, 8H)
    zH = jnp.zeros((H, 4 * H), jnp.float32)
    whh_cat = jnp.concatenate(
        [_interleave_gates(params["w_hh_f"].T, zH, H),   # h_fwd rows hit only fwd gate cols
         _interleave_gates(zH, params["w_hh_b"].T, H)],  # h_bwd rows hit only bwd gate cols
        axis=0)                                                                # (2H, 8H)

    # fc weight arranged per fused step: rows [0:H] = fwd weights at time t,
    # rows [H:2H] = bwd weights at time T-1-t (matches the stacked h at step t).
    wfc_t = params["w_fc"].T.reshape(T, 2 * H, O)
    wfc_steps = jnp.concatenate([wfc_t[:, :H, :], wfc_t[::-1, H:, :]], axis=1)  # (T, 2H, O)
    bfc = params["b_fc"].reshape(1, O)

    vmem = pl.BlockSpec(memory_space=pltpu.MemorySpace.VMEM)

    return pl.pallas_call(
        _lstm_clog_kernel,
        out_shape=jax.ShapeDtypeStruct((B, O), jnp.float32),
        in_specs=[vmem] * 6,
        out_specs=vmem,
        scratch_shapes=[pltpu.VMEM((T, B, 8 * H), jnp.float32)],
    )(x_comb, wih_cat, whh_cat, b_cat, wfc_steps, bfc)


def make_params(key, channels_num, seq_size, out_classes):
    H = HIDDEN
    k = 1.0 / jnp.sqrt(jnp.float32(H))
    ks = jax.random.split(key, 10)

    def u(kk, shape):
        return jax.random.uniform(kk, shape, jnp.float32, -k, k)

    return {
        "w_ih_f": u(ks[0], (4 * H, channels_num)),
        "w_hh_f": u(ks[1], (4 * H, H)),
        "b_ih_f": u(ks[2], (4 * H,)),
        "b_hh_f": u(ks[3], (4 * H,)),
        "w_ih_b": u(ks[4], (4 * H, channels_num)),
        "w_hh_b": u(ks[5], (4 * H, H)),
        "b_ih_b": u(ks[6], (4 * H,)),
        "b_hh_b": u(ks[7], (4 * H,)),
        "w_fc": u(ks[8], (out_classes, seq_size * 2 * H)),
        "b_fc": u(ks[9], (out_classes,)),
    }


def ref_forward(x, params):
    """Pure-JAX reference matching nn.LSTM(bidirectional) + nn.Linear."""
    B, T, C = x.shape
    H = HIDDEN

    def cell(carry, x_t, wih, whh, bih, bhh):
        h, c = carry
        gates = x_t @ wih.T + bih + h @ whh.T + bhh
        i, f, g, o = jnp.split(gates, 4, axis=-1)
        i, f, g, o = jax.nn.sigmoid(i), jax.nn.sigmoid(f), jnp.tanh(g), jax.nn.sigmoid(o)
        c = f * c + i * g
        h = o * jnp.tanh(c)
        return (h, c), h

    h0 = jnp.zeros((B, H), jnp.float32)
    c0 = jnp.zeros((B, H), jnp.float32)
    xs = jnp.transpose(x, (1, 0, 2))

    _, hf = lax.scan(
        lambda carry, xt: cell(carry, xt, params["w_ih_f"], params["w_hh_f"],
                               params["b_ih_f"], params["b_hh_f"]),
        (h0, c0), xs)
    _, hb = lax.scan(
        lambda carry, xt: cell(carry, xt, params["w_ih_b"], params["w_hh_b"],
                               params["b_ih_b"], params["b_hh_b"]),
        (h0, c0), xs[::-1])
    hb = hb[::-1]

    y = jnp.concatenate([hf, hb], axis=-1)                 # (T, B, 2H)
    y = jnp.transpose(y, (1, 0, 2)).reshape(B, -1)         # (B, T*2H)
    return y @ params["w_fc"].T + params["b_fc"]


if __name__ == "__main__":
    batch, seq, channels, out_classes = 2, 8, 4, 5

    key = jax.random.PRNGKey(0)
    k_x, k_p = jax.random.split(key)
    x = jax.random.normal(k_x, (batch, seq, channels), jnp.float32)
    params = make_params(k_p, channels, seq, out_classes)

    out = jax.block_until_ready(lstm_clog_forward(x, params))
    ref = jax.block_until_ready(ref_forward(x, params))

    assert out.shape == (batch, out_classes)
    assert jnp.allclose(out, ref, atol=1e-4, rtol=1e-4), "mismatch vs JAX reference"
    print("KERNEL_OK")
</pallas_src>

<mosaic_0001>
module attributes {stable_mosaic.version = 11 : i64} {
  func.func @_lstm_clog_kernel(%arg0: memref<16x8xf32, #tpu.memory_space<vmem>>, %arg1: memref<8x256xf32, #tpu.memory_space<vmem>>, %arg2: memref<64x256xf32, #tpu.memory_space<vmem>>, %arg3: memref<1x256xf32, #tpu.memory_space<vmem>>, %arg4: memref<8x64x5xf32, #tpu.memory_space<vmem>>, %arg5: memref<1x5xf32, #tpu.memory_space<vmem>>, %arg6: memref<2x5xf32, #tpu.memory_space<vmem>>, %arg7: memref<8x2x256xf32, #tpu.memory_space<vmem>>) attributes {dimension_semantics = [], scalar_prefetch = 0 : i64, scratch_operands = 1 : i64, tpu.core_type = #tpu.core_type<tc>} {
    %c0 = arith.constant 0 : index
    %c0_0 = arith.constant 0 : index
    %0 = vector.load %arg0[%c0, %c0_0] : memref<16x8xf32, #tpu.memory_space<vmem>>, vector<16x8xf32>
    %c0_1 = arith.constant 0 : index
    %c0_2 = arith.constant 0 : index
    %1 = vector.load %arg1[%c0_1, %c0_2] : memref<8x256xf32, #tpu.memory_space<vmem>>, vector<8x256xf32>
    %cst = arith.constant dense<0.000000e+00> : vector<16x256xf32>
    %2 = tpu.matmul %0, %1, %cst {dimension_numbers = #tpu.dot_dimension_numbers<[1], [0], [0], [1], [0, 0, 1, 1], [], []>} : vector<16x8xf32>, vector<8x256xf32>, vector<16x256xf32> -> vector<16x256xf32>
    %c0_3 = arith.constant 0 : index
    %c0_4 = arith.constant 0 : index
    %3 = vector.load %arg3[%c0_3, %c0_4] : memref<1x256xf32, #tpu.memory_space<vmem>>, vector<1x256xf32>
    %4 = vector.broadcast %3 : vector<1x256xf32> to vector<16x256xf32>
    %5 = arith.addf %2, %4 : vector<16x256xf32>
    %6 = vector.extract_strided_slice %5 {offsets = [0, 0], sizes = [2, 256], strides = [1, 1]} : vector<16x256xf32> to vector<2x256xf32>
    %c0_5 = arith.constant 0 : index
    %c0_6 = arith.constant 0 : index
    %c0_7 = arith.constant 0 : index
    %7 = vector.load %arg7[%c0_5, %c0_6, %c0_7] : memref<8x2x256xf32, #tpu.memory_space<vmem>>, vector<1x2x256xf32>
    %8 = vector.shape_cast %7 : vector<1x2x256xf32> to vector<2x256xf32>
    %9 = vector.shape_cast %6 : vector<2x256xf32> to vector<1x2x256xf32>
    tpu.vector_store %arg7[%c0_5, %c0_6, %c0_7], %9 {strides = array<i32>} : memref<8x2x256xf32, #tpu.memory_space<vmem>>, vector<1x2x256xf32>,
    %10 = vector.extract_strided_slice %5 {offsets = [2, 0], sizes = [2, 256], strides = [1, 1]} : vector<16x256xf32> to vector<2x256xf32>
    %c1 = arith.constant 1 : index
    %c0_8 = arith.constant 0 : index
    %c0_9 = arith.constant 0 : index
    %11 = vector.load %arg7[%c1, %c0_8, %c0_9] : memref<8x2x256xf32, #tpu.memory_space<vmem>>, vector<1x2x256xf32>
    %12 = vector.shape_cast %11 : vector<1x2x256xf32> to vector<2x256xf32>
    %13 = vector.shape_cast %10 : vector<2x256xf32> to vector<1x2x256xf32>
    tpu.vector_store %arg7[%c1, %c0_8, %c0_9], %13 {strides = array<i32>} : memref<8x2x256xf32, #tpu.memory_space<vmem>>, vector<1x2x256xf32>,
    %14 = vector.extract_strided_slice %5 {offsets = [4, 0], sizes = [2, 256], strides = [1, 1]} : vector<16x256xf32> to vector<2x256xf32>
    %c2 = arith.constant 2 : index
    %c0_10 = arith.constant 0 : index
    %c0_11 = arith.constant 0 : index
    %15 = vector.load %arg7[%c2, %c0_10, %c0_11] : memref<8x2x256xf32, #tpu.memory_space<vmem>>, vector<1x2x256xf32>
    %16 = vector.shape_cast %15 : vector<1x2x256xf32> to vector<2x256xf32>
    %17 = vector.shape_cast %14 : vector<2x256xf32> to vector<1x2x256xf32>
    tpu.vector_store %arg7[%c2, %c0_10, %c0_11], %17 {strides = array<i32>} : memref<8x2x256xf32, #tpu.memory_space<vmem>>, vector<1x2x256xf32>,
    %18 = vector.extract_strided_slice %5 {offsets = [6, 0], sizes = [2, 256], strides = [1, 1]} : vector<16x256xf32> to vector<2x256xf32>
    %c3 = arith.constant 3 : index
    %c0_12 = arith.constant 0 : index
    %c0_13 = arith.constant 0 : index
    %19 = vector.load %arg7[%c3, %c0_12, %c0_13] : memref<8x2x256xf32, #tpu.memory_space<vmem>>, vector<1x2x256xf32>
    %20 = vector.shape_cast %19 : vector<1x2x256xf32> to vector<2x256xf32>
    %21 = vector.shape_cast %18 : vector<2x256xf32> to vector<1x2x256xf32>
    tpu.vector_store %arg7[%c3, %c0_12, %c0_13], %21 {strides = array<i32>} : memref<8x2x256xf32, #tpu.memory_space<vmem>>, vector<1x2x256xf32>,
    %22 = vector.extract_strided_slice %5 {offsets = [8, 0], sizes = [2, 256], strides = [1, 1]} : vector<16x256xf32> to vector<2x256xf32>
    %c4 = arith.constant 4 : index
    %c0_14 = arith.constant 0 : index
    %c0_15 = arith.constant 0 : index
    %23 = vector.load %arg7[%c4, %c0_14, %c0_15] : memref<8x2x256xf32, #tpu.memory_space<vmem>>, vector<1x2x256xf32>
    %24 = vector.shape_cast %23 : vector<1x2x256xf32> to vector<2x256xf32>
    %25 = vector.shape_cast %22 : vector<2x256xf32> to vector<1x2x256xf32>
    tpu.vector_store %arg7[%c4, %c0_14, %c0_15], %25 {strides = array<i32>} : memref<8x2x256xf32, #tpu.memory_space<vmem>>, vector<1x2x256xf32>,
    %26 = vector.extract_strided_slice %5 {offsets = [10, 0], sizes = [2, 256], strides = [1, 1]} : vector<16x256xf32> to vector<2x256xf32>
    %c5 = arith.constant 5 : index
    %c0_16 = arith.constant 0 : index
    %c0_17 = arith.constant 0 : index
    %27 = vector.load %arg7[%c5, %c0_16, %c0_17] : memref<8x2x256xf32, #tpu.memory_space<vmem>>, vector<1x2x256xf32>
    %28 = vector.shape_cast %27 : vector<1x2x256xf32> to vector<2x256xf32>
    %29 = vector.shape_cast %26 : vector<2x256xf32> to vector<1x2x256xf32>
    tpu.vector_store %arg7[%c5, %c0_16, %c0_17], %29 {strides = array<i32>} : memref<8x2x256xf32, #tpu.memory_space<vmem>>, vector<1x2x256xf32>,
    %30 = vector.extract_strided_slice %5 {offsets = [12, 0], sizes = [2, 256], strides = [1, 1]} : vector<16x256xf32> to vector<2x256xf32>
    %c6 = arith.constant 6 : index
    %c0_18 = arith.constant 0 : index
    %c0_19 = arith.constant 0 : index
    %31 = vector.load %arg7[%c6, %c0_18, %c0_19] : memref<8x2x256xf32, #tpu.memory_space<vmem>>, vector<1x2x256xf32>
    %32 = vector.shape_cast %31 : vector<1x2x256xf32> to vector<2x256xf32>
    %33 = vector.shape_cast %30 : vector<2x256xf32> to vector<1x2x256xf32>
    tpu.vector_store %arg7[%c6, %c0_18, %c0_19], %33 {strides = array<i32>} : memref<8x2x256xf32, #tpu.memory_space<vmem>>, vector<1x2x256xf32>,
    %34 = vector.extract_strided_slice %5 {offsets = [14, 0], sizes = [2, 256], strides = [1, 1]} : vector<16x256xf32> to vector<2x256xf32>
    %c7 = arith.constant 7 : index
    %c0_20 = arith.constant 0 : index
    %c0_21 = arith.constant 0 : index
    %35 = vector.load %arg7[%c7, %c0_20, %c0_21] : memref<8x2x256xf32, #tpu.memory_space<vmem>>, vector<1x2x256xf32>
    %36 = vector.shape_cast %35 : vector<1x2x256xf32> to vector<2x256xf32>
    %37 = vector.shape_cast %34 : vector<2x256xf32> to vector<1x2x256xf32>
    tpu.vector_store %arg7[%c7, %c0_20, %c0_21], %37 {strides = array<i32>} : memref<8x2x256xf32, #tpu.memory_space<vmem>>, vector<1x2x256xf32>,
    %c0_22 = arith.constant 0 : index
    %c0_23 = arith.constant 0 : index
    %38 = vector.load %arg2[%c0_22, %c0_23] : memref<64x256xf32, #tpu.memory_space<vmem>>, vector<64x256xf32>
    %cst_24 = arith.constant 0.000000e+00 : f32
    %39 = vector.broadcast %cst_24 : f32 to vector<2x64xf32>
    %c0_25 = arith.constant 0 : index
    %c0_26 = arith.constant 0 : index
    %c0_27 = arith.constant 0 : index
    %40 = vector.load %arg7[%c0_25, %c0_26, %c0_27] : memref<8x2x256xf32, #tpu.memory_space<vmem>>, vector<1x2x256xf32>
    %41 = vector.shape_cast %40 : vector<1x2x256xf32> to vector<2x256xf32>
    %42 = vector.extract_strided_slice %41 {offsets = [0, 0], sizes = [2, 192], strides = [1, 1]} : vector<2x256xf32> to vector<2x192xf32>
    %43 = arith.negf %42 : vector<2x192xf32>
    %44 = math.exp %43 : vector<2x192xf32>
    %cst_28 = arith.constant 1.000000e+00 : f32
    %45 = vector.broadcast %cst_28 : f32 to vector<2x192xf32>
    %46 = arith.addf %45, %44 : vector<2x192xf32>
    %47 = arith.divf %45, %46 : vector<2x192xf32>
    %48 = vector.extract_strided_slice %41 {offsets = [0, 192], sizes = [2, 64], strides = [1, 1]} : vector<2x256xf32> to vector<2x64xf32>
    %49 = math.tanh %48 : vector<2x64xf32>
    %50 = vector.extract_strided_slice %47 {offsets = [0, 0], sizes = [2, 64], strides = [1, 1]} : vector<2x192xf32> to vector<2x64xf32>
    %51 = vector.extract_strided_slice %47 {offsets = [0, 64], sizes = [2, 64], strides = [1, 1]} : vector<2x192xf32> to vector<2x64xf32>
    %52 = vector.extract_strided_slice %47 {offsets = [0, 128], sizes = [2, 64], strides = [1, 1]} : vector<2x192xf32> to vector<2x64xf32>
    %53 = arith.mulf %51, %39 : vector<2x64xf32>
    %54 = arith.mulf %50, %49 : vector<2x64xf32>
    %55 = arith.addf %53, %54 : vector<2x64xf32>
    %56 = math.tanh %55 : vector<2x64xf32>
    %57 = arith.mulf %52, %56 : vector<2x64xf32>
    %c1_29 = arith.constant 1 : index
    %c0_30 = arith.constant 0 : index
    %c0_31 = arith.constant 0 : index
    %58 = vector.load %arg7[%c1_29, %c0_30, %c0_31] : memref<8x2x256xf32, #tpu.memory_space<vmem>>, vector<1x2x256xf32>
    %59 = vector.shape_cast %58 : vector<1x2x256xf32> to vector<2x256xf32>
    %cst_32 = arith.constant dense<0.000000e+00> : vector<2x256xf32>
    %60 = tpu.matmul %57, %38, %cst_32 {dimension_numbers = #tpu.dot_dimension_numbers<[1], [0], [0], [1], [0, 0, 1, 1], [], []>} : vector<2x64xf32>, vector<64x256xf32>, vector<2x256xf32> -> vector<2x256xf32>
    %61 = arith.addf %59, %60 : vector<2x256xf32>
    %62 = vector.extract_strided_slice %61 {offsets = [0, 0], sizes = [2, 192], strides = [1, 1]} : vector<2x256xf32> to vector<2x192xf32>
    %63 = arith.negf %62 : vector<2x192xf32>
    %64 = math.exp %63 : vector<2x192xf32>
    %cst_33 = arith.constant 1.000000e+00 : f32
    %65 = vector.broadcast %cst_33 : f32 to vector<2x192xf32>
    %66 = arith.addf %65, %64 : vector<2x192xf32>
    %67 = arith.divf %65, %66 : vector<2x192xf32>
    %68 = vector.extract_strided_slice %61 {offsets = [0, 192], sizes = [2, 64], strides = [1, 1]} : vector<2x256xf32> to vector<2x64xf32>
    %69 = math.tanh %68 : vector<2x64xf32>
    %70 = vector.extract_strided_slice %67 {offsets = [0, 0], sizes = [2, 64], strides = [1, 1]} : vector<2x192xf32> to vector<2x64xf32>
    %71 = vector.extract_strided_slice %67 {offsets = [0, 64], sizes = [2, 64], strides = [1, 1]} : vector<2x192xf32> to vector<2x64xf32>
    %72 = vector.extract_strided_slice %67 {offsets = [0, 128], sizes = [2, 64], strides = [1, 1]} : vector<2x192xf32> to vector<2x64xf32>
    %73 = arith.mulf %71, %55 : vector<2x64xf32>
    %74 = arith.mulf %70, %69 : vector<2x64xf32>
    %75 = arith.addf %73, %74 : vector<2x64xf32>
    %76 = math.tanh %75 : vector<2x64xf32>
    %77 = arith.mulf %72, %76 : vector<2x64xf32>
    %c2_34 = arith.constant 2 : index
    %c0_35 = arith.constant 0 : index
    %c0_36 = arith.constant 0 : index
    %78 = vector.load %arg7[%c2_34, %c0_35, %c0_36] : memref<8x2x256xf32, #tpu.memory_space<vmem>>, vector<1x2x256xf32>
    %79 = vector.shape_cast %78 : vector<1x2x256xf32> to vector<2x256xf32>
    %cst_37 = arith.constant dense<0.000000e+00> : vector<2x256xf32>
    %80 = tpu.matmul %77, %38, %cst_37 {dimension_numbers = #tpu.dot_dimension_numbers<[1], [0], [0], [1], [0, 0, 1, 1], [], []>} : vector<2x64xf32>, vector<64x256xf32>, vector<2x256xf32> -> vector<2x256xf32>
    %81 = arith.addf %79, %80 : vector<2x256xf32>
    %82 = vector.extract_strided_slice %81 {offsets = [0, 0], sizes = [2, 192], strides = [1, 1]} : vector<2x256xf32> to vector<2x192xf32>
    %83 = arith.negf %82 : vector<2x192xf32>
    %84 = math.exp %83 : vector<2x192xf32>
    %cst_38 = arith.constant 1.000000e+00 : f32
    %85 = vector.broadcast %cst_38 : f32 to vector<2x192xf32>
    %86 = arith.addf %85, %84 : vector<2x192xf32>
    %87 = arith.divf %85, %86 : vector<2x192xf32>
    %88 = vector.extract_strided_slice %81 {offsets = [0, 192], sizes = [2, 64], strides = [1, 1]} : vector<2x256xf32> to vector<2x64xf32>
    %89 = math.tanh %88 : vector<2x64xf32>
    %90 = vector.extract_strided_slice %87 {offsets = [0, 0], sizes = [2, 64], strides = [1, 1]} : vector<2x192xf32> to vector<2x64xf32>
    %91 = vector.extract_strided_slice %87 {offsets = [0, 64], sizes = [2, 64], strides = [1, 1]} : vector<2x192xf32> to vector<2x64xf32>
    %92 = vector.extract_strided_slice %87 {offsets = [0, 128], sizes = [2, 64], strides = [1, 1]} : vector<2x192xf32> to vector<2x64xf32>
    %93 = arith.mulf %91, %75 : vector<2x64xf32>
    %94 = arith.mulf %90, %89 : vector<2x64xf32>
    %95 = arith.addf %93, %94 : vector<2x64xf32>
    %96 = math.tanh %95 : vector<2x64xf32>
    %97 = arith.mulf %92, %96 : vector<2x64xf32>
    %c3_39 = arith.constant 3 : index
    %c0_40 = arith.constant 0 : index
    %c0_41 = arith.constant 0 : index
    %98 = vector.load %arg7[%c3_39, %c0_40, %c0_41] : memref<8x2x256xf32, #tpu.memory_space<vmem>>, vector<1x2x256xf32>
    %99 = vector.shape_cast %98 : vector<1x2x256xf32> to vector<2x256xf32>
    %cst_42 = arith.constant dense<0.000000e+00> : vector<2x256xf32>
    %100 = tpu.matmul %97, %38, %cst_42 {dimension_numbers = #tpu.dot_dimension_numbers<[1], [0], [0], [1], [0, 0, 1, 1], [], []>} : vector<2x64xf32>, vector<64x256xf32>, vector<2x256xf32> -> vector<2x256xf32>
    %101 = arith.addf %99, %100 : vector<2x256xf32>
    %102 = vector.extract_strided_slice %101 {offsets = [0, 0], sizes = [2, 192], strides = [1, 1]} : vector<2x256xf32> to vector<2x192xf32>
    %103 = arith.negf %102 : vector<2x192xf32>
    %104 = math.exp %103 : vector<2x192xf32>
    %cst_43 = arith.constant 1.000000e+00 : f32
    %105 = vector.broadcast %cst_43 : f32 to vector<2x192xf32>
    %106 = arith.addf %105, %104 : vector<2x192xf32>
    %107 = arith.divf %105, %106 : vector<2x192xf32>
    %108 = vector.extract_strided_slice %101 {offsets = [0, 192], sizes = [2, 64], strides = [1, 1]} : vector<2x256xf32> to vector<2x64xf32>
    %109 = math.tanh %108 : vector<2x64xf32>
    %110 = vector.extract_strided_slice %107 {offsets = [0, 0], sizes = [2, 64], strides = [1, 1]} : vector<2x192xf32> to vector<2x64xf32>
    %111 = vector.extract_strided_slice %107 {offsets = [0, 64], sizes = [2, 64], strides = [1, 1]} : vector<2x192xf32> to vector<2x64xf32>
    %112 = vector.extract_strided_slice %107 {offsets = [0, 128], sizes = [2, 64], strides = [1, 1]} : vector<2x192xf32> to vector<2x64xf32>
    %113 = arith.mulf %111, %95 : vector<2x64xf32>
    %114 = arith.mulf %110, %109 : vector<2x64xf32>
    %115 = arith.addf %113, %114 : vector<2x64xf32>
    %116 = math.tanh %115 : vector<2x64xf32>
    %117 = arith.mulf %112, %116 : vector<2x64xf32>
    %c4_44 = arith.constant 4 : index
    %c0_45 = arith.constant 0 : index
    %c0_46 = arith.constant 0 : index
    %118 = vector.load %arg7[%c4_44, %c0_45, %c0_46] : memref<8x2x256xf32, #tpu.memory_space<vmem>>, vector<1x2x256xf32>
    %119 = vector.shape_cast %118 : vector<1x2x256xf32> to vector<2x256xf32>
    %cst_47 = arith.constant dense<0.000000e+00> : vector<2x256xf32>
    %120 = tpu.matmul %117, %38, %cst_47 {dimension_numbers = #tpu.dot_dimension_numbers<[1], [0], [0], [1], [0, 0, 1, 1], [], []>} : vector<2x64xf32>, vector<64x256xf32>, vector<2x256xf32> -> vector<2x256xf32>
    %121 = arith.addf %119, %120 : vector<2x256xf32>
    %122 = vector.extract_strided_slice %121 {offsets = [0, 0], sizes = [2, 192], strides = [1, 1]} : vector<2x256xf32> to vector<2x192xf32>
    %123 = arith.negf %122 : vector<2x192xf32>
    %124 = math.exp %123 : vector<2x192xf32>
    %cst_48 = arith.constant 1.000000e+00 : f32
    %125 = vector.broadcast %cst_48 : f32 to vector<2x192xf32>
    %126 = arith.addf %125, %124 : vector<2x192xf32>
    %127 = arith.divf %125, %126 : vector<2x192xf32>
    %128 = vector.extract_strided_slice %121 {offsets = [0, 192], sizes = [2, 64], strides = [1, 1]} : vector<2x256xf32> to vector<2x64xf32>
    %129 = math.tanh %128 : vector<2x64xf32>
    %130 = vector.extract_strided_slice %127 {offsets = [0, 0], sizes = [2, 64], strides = [1, 1]} : vector<2x192xf32> to vector<2x64xf32>
    %131 = vector.extract_strided_slice %127 {offsets = [0, 64], sizes = [2, 64], strides = [1, 1]} : vector<2x192xf32> to vector<2x64xf32>
    %132 = vector.extract_strided_slice %127 {offsets = [0, 128], sizes = [2, 64], strides = [1, 1]} : vector<2x192xf32> to vector<2x64xf32>
    %133 = arith.mulf %131, %115 : vector<2x64xf32>
    %134 = arith.mulf %130, %129 : vector<2x64xf32>
    %135 = arith.addf %133, %134 : vector<2x64xf32>
    %136 = math.tanh %135 : vector<2x64xf32>
    %137 = arith.mulf %132, %136 : vector<2x64xf32>
    %c5_49 = arith.constant 5 : index
    %c0_50 = arith.constant 0 : index
    %c0_51 = arith.constant 0 : index
    %138 = vector.load %arg7[%c5_49, %c0_50, %c0_51] : memref<8x2x256xf32, #tpu.memory_space<vmem>>, vector<1x2x256xf32>
    %139 = vector.shape_cast %138 : vector<1x2x256xf32> to vector<2x256xf32>
    %cst_52 = arith.constant dense<0.000000e+00> : vector<2x256xf32>
    %140 = tpu.matmul %137, %38, %cst_52 {dimension_numbers = #tpu.dot_dimension_numbers<[1], [0], [0], [1], [0, 0, 1, 1], [], []>} : vector<2x64xf32>, vector<64x256xf32>, vector<2x256xf32> -> vector<2x256xf32>
    %141 = arith.addf %139, %140 : vector<2x256xf32>
    %142 = vector.extract_strided_slice %141 {offsets = [0, 0], sizes = [2, 192], strides = [1, 1]} : vector<2x256xf32> to vector<2x192xf32>
    %143 = arith.negf %142 : vector<2x192xf32>
    %144 = math.exp %143 : vector<2x192xf32>
    %cst_53 = arith.constant 1.000000e+00 : f32
    %145 = vector.broadcast %cst_53 : f32 to vector<2x192xf32>
    %146 = arith.addf %145, %144 : vector<2x192xf32>
    %147 = arith.divf %145, %146 : vector<2x192xf32>
    %148 = vector.extract_strided_slice %141 {offsets = [0, 192], sizes = [2, 64], strides = [1, 1]} : vector<2x256xf32> to vector<2x64xf32>
    %149 = math.tanh %148 : vector<2x64xf32>
    %150 = vector.extract_strided_slice %147 {offsets = [0, 0], sizes = [2, 64], strides = [1, 1]} : vector<2x192xf32> to vector<2x64xf32>
    %151 = vector.extract_strided_slice %147 {offsets = [0, 64], sizes = [2, 64], strides = [1, 1]} : vector<2x192xf32> to vector<2x64xf32>
    %152 = vector.extract_strided_slice %147 {offsets = [0, 128], sizes = [2, 64], strides = [1, 1]} : vector<2x192xf32> to vector<2x64xf32>
    %153 = arith.mulf %151, %135 : vector<2x64xf32>
    %154 = arith.mulf %150, %149 : vector<2x64xf32>
    %155 = arith.addf %153, %154 : vector<2x64xf32>
    %156 = math.tanh %155 : vector<2x64xf32>
    %157 = arith.mulf %152, %156 : vector<2x64xf32>
    %c6_54 = arith.constant 6 : index
    %c0_55 = arith.constant 0 : index
    %c0_56 = arith.constant 0 : index
    %158 = vector.load %arg7[%c6_54, %c0_55, %c0_56] : memref<8x2x256xf32, #tpu.memory_space<vmem>>, vector<1x2x256xf32>
    %159 = vector.shape_cast %158 : vector<1x2x256xf32> to vector<2x256xf32>
    %cst_57 = arith.constant dense<0.000000e+00> : vector<2x256xf32>
    %160 = tpu.matmul %157, %38, %cst_57 {dimension_numbers = #tpu.dot_dimension_numbers<[1], [0], [0], [1], [0, 0, 1, 1], [], []>} : vector<2x64xf32>, vector<64x256xf32>, vector<2x256xf32> -> vector<2x256xf32>
    %161 = arith.addf %159, %160 : vector<2x256xf32>
    %162 = vector.extract_strided_slice %161 {offsets = [0, 0], sizes = [2, 192], strides = [1, 1]} : vector<2x256xf32> to vector<2x192xf32>
    %163 = arith.negf %162 : vector<2x192xf32>
    %164 = math.exp %163 : vector<2x192xf32>
    %cst_58 = arith.constant 1.000000e+00 : f32
    %165 = vector.broadcast %cst_58 : f32 to vector<2x192xf32>
    %166 = arith.addf %165, %164 : vector<2x192xf32>
    %167 = arith.divf %165, %166 : vector<2x192xf32>
    %168 = vector.extract_strided_slice %161 {offsets = [0, 192], sizes = [2, 64], strides = [1, 1]} : vector<2x256xf32> to vector<2x64xf32>
    %169 = math.tanh %168 : vector<2x64xf32>
    %170 = vector.extract_strided_slice %167 {offsets = [0, 0], sizes = [2, 64], strides = [1, 1]} : vector<2x192xf32> to vector<2x64xf32>
    %171 = vector.extract_strided_slice %167 {offsets = [0, 64], sizes = [2, 64], strides = [1, 1]} : vector<2x192xf32> to vector<2x64xf32>
    %172 = vector.extract_strided_slice %167 {offsets = [0, 128], sizes = [2, 64], strides = [1, 1]} : vector<2x192xf32> to vector<2x64xf32>
    %173 = arith.mulf %171, %155 : vector<2x64xf32>
    %174 = arith.mulf %170, %169 : vector<2x64xf32>
    %175 = arith.addf %173, %174 : vector<2x64xf32>
    %176 = math.tanh %175 : vector<2x64xf32>
    %177 = arith.mulf %172, %176 : vector<2x64xf32>
    %c7_59 = arith.constant 7 : index
    %c0_60 = arith.constant 0 : index
    %c0_61 = arith.constant 0 : index
    %178 = vector.load %arg7[%c7_59, %c0_60, %c0_61] : memref<8x2x256xf32, #tpu.memory_space<vmem>>, vector<1x2x256xf32>
    %179 = vector.shape_cast %178 : vector<1x2x256xf32> to vector<2x256xf32>
    %cst_62 = arith.constant dense<0.000000e+00> : vector<2x256xf32>
    %180 = tpu.matmul %177, %38, %cst_62 {dimension_numbers = #tpu.dot_dimension_numbers<[1], [0], [0], [1], [0, 0, 1, 1], [], []>} : vector<2x64xf32>, vector<64x256xf32>, vector<2x256xf32> -> vector<2x256xf32>
    %181 = arith.addf %179, %180 : vector<2x256xf32>
    %182 = vector.extract_strided_slice %181 {offsets = [0, 0], sizes = [2, 192], strides = [1, 1]} : vector<2x256xf32> to vector<2x192xf32>
    %183 = arith.negf %182 : vector<2x192xf32>
    %184 = math.exp %183 : vector<2x192xf32>
    %cst_63 = arith.constant 1.000000e+00 : f32
    %185 = vector.broadcast %cst_63 : f32 to vector<2x192xf32>
    %186 = arith.addf %185, %184 : vector<2x192xf32>
    %187 = arith.divf %185, %186 : vector<2x192xf32>
    %188 = vector.extract_strided_slice %181 {offsets = [0, 192], sizes = [2, 64], strides = [1, 1]} : vector<2x256xf32> to vector<2x64xf32>
    %189 = math.tanh %188 : vector<2x64xf32>
    %190 = vector.extract_strided_slice %187 {offsets = [0, 0], sizes = [2, 64], strides = [1, 1]} : vector<2x192xf32> to vector<2x64xf32>
    %191 = vector.extract_strided_slice %187 {offsets = [0, 64], sizes = [2, 64], strides = [1, 1]} : vector<2x192xf32> to vector<2x64xf32>
    %192 = vector.extract_strided_slice %187 {offsets = [0, 128], sizes = [2, 64], strides = [1, 1]} : vector<2x192xf32> to vector<2x64xf32>
    %193 = arith.mulf %191, %175 : vector<2x64xf32>
    %194 = arith.mulf %190, %189 : vector<2x64xf32>
    %195 = arith.addf %193, %194 : vector<2x64xf32>
    %196 = math.tanh %195 : vector<2x64xf32>
    %197 = arith.mulf %192, %196 : vector<2x64xf32>
    %cst_64 = arith.constant 0.000000e+00 : f32
    %198 = vector.broadcast %cst_64 : f32 to vector<2x5xf32>
    %c0_65 = arith.constant 0 : index
    %c0_66 = arith.constant 0 : index
    %c0_67 = arith.constant 0 : index
    %199 = vector.load %arg4[%c0_65, %c0_66, %c0_67] : memref<8x64x5xf32, #tpu.memory_space<vmem>>, vector<1x64x5xf32>
    %200 = vector.shape_cast %199 : vector<1x64x5xf32> to vector<64x5xf32>
    %cst_68 = arith.constant dense<0.000000e+00> : vector<2x5xf32>
    %201 = tpu.matmul %57, %200, %cst_68 {dimension_numbers = #tpu.dot_dimension_numbers<[1], [0], [0], [1], [0, 0, 1, 1], [], []>} : vector<2x64xf32>, vector<64x5xf32>, vector<2x5xf32> -> vector<2x5xf32>
    %202 = arith.addf %198, %201 : vector<2x5xf32>
    %c1_69 = arith.constant 1 : index
    %c0_70 = arith.constant 0 : index
    %c0_71 = arith.constant 0 : index
    %203 = vector.load %arg4[%c1_69, %c0_70, %c0_71] : memref<8x64x5xf32, #tpu.memory_space<vmem>>, vector<1x64x5xf32>
    %204 = vector.shape_cast %203 : vector<1x64x5xf32> to vector<64x5xf32>
    %cst_72 = arith.constant dense<0.000000e+00> : vector<2x5xf32>
    %205 = tpu.matmul %77, %204, %cst_72 {dimension_numbers = #tpu.dot_dimension_numbers<[1], [0], [0], [1], [0, 0, 1, 1], [], []>} : vector<2x64xf32>, vector<64x5xf32>, vector<2x5xf32> -> vector<2x5xf32>
    %206 = arith.addf %202, %205 : vector<2x5xf32>
    %c2_73 = arith.constant 2 : index
    %c0_74 = arith.constant 0 : index
    %c0_75 = arith.constant 0 : index
    %207 = vector.load %arg4[%c2_73, %c0_74, %c0_75] : memref<8x64x5xf32, #tpu.memory_space<vmem>>, vector<1x64x5xf32>
    %208 = vector.shape_cast %207 : vector<1x64x5xf32> to vector<64x5xf32>
    %cst_76 = arith.constant dense<0.000000e+00> : vector<2x5xf32>
    %209 = tpu.matmul %97, %208, %cst_76 {dimension_numbers = #tpu.dot_dimension_numbers<[1], [0], [0], [1], [0, 0, 1, 1], [], []>} : vector<2x64xf32>, vector<64x5xf32>, vector<2x5xf32> -> vector<2x5xf32>
    %210 = arith.addf %206, %209 : vector<2x5xf32>
    %c3_77 = arith.constant 3 : index
    %c0_78 = arith.constant 0 : index
    %c0_79 = arith.constant 0 : index
    %211 = vector.load %arg4[%c3_77, %c0_78, %c0_79] : memref<8x64x5xf32, #tpu.memory_space<vmem>>, vector<1x64x5xf32>
    %212 = vector.shape_cast %211 : vector<1x64x5xf32> to vector<64x5xf32>
    %cst_80 = arith.constant dense<0.000000e+00> : vector<2x5xf32>
    %213 = tpu.matmul %117, %212, %cst_80 {dimension_numbers = #tpu.dot_dimension_numbers<[1], [0], [0], [1], [0, 0, 1, 1], [], []>} : vector<2x64xf32>, vector<64x5xf32>, vector<2x5xf32> -> vector<2x5xf32>
    %214 = arith.addf %210, %213 : vector<2x5xf32>
    %c4_81 = arith.constant 4 : index
    %c0_82 = arith.constant 0 : index
    %c0_83 = arith.constant 0 : index
    %215 = vector.load %arg4[%c4_81, %c0_82, %c0_83] : memref<8x64x5xf32, #tpu.memory_space<vmem>>, vector<1x64x5xf32>
    %216 = vector.shape_cast %215 : vector<1x64x5xf32> to vector<64x5xf32>
    %cst_84 = arith.constant dense<0.000000e+00> : vector<2x5xf32>
    %217 = tpu.matmul %137, %216, %cst_84 {dimension_numbers = #tpu.dot_dimension_numbers<[1], [0], [0], [1], [0, 0, 1, 1], [], []>} : vector<2x64xf32>, vector<64x5xf32>, vector<2x5xf32> -> vector<2x5xf32>
    %218 = arith.addf %214, %217 : vector<2x5xf32>
    %c5_85 = arith.constant 5 : index
    %c0_86 = arith.constant 0 : index
    %c0_87 = arith.constant 0 : index
    %219 = vector.load %arg4[%c5_85, %c0_86, %c0_87] : memref<8x64x5xf32, #tpu.memory_space<vmem>>, vector<1x64x5xf32>
    %220 = vector.shape_cast %219 : vector<1x64x5xf32> to vector<64x5xf32>
    %cst_88 = arith.constant dense<0.000000e+00> : vector<2x5xf32>
    %221 = tpu.matmul %157, %220, %cst_88 {dimension_numbers = #tpu.dot_dimension_numbers<[1], [0], [0], [1], [0, 0, 1, 1], [], []>} : vector<2x64xf32>, vector<64x5xf32>, vector<2x5xf32> -> vector<2x5xf32>
    %222 = arith.addf %218, %221 : vector<2x5xf32>
    %c6_89 = arith.constant 6 : index
    %c0_90 = arith.constant 0 : index
    %c0_91 = arith.constant 0 : index
    %223 = vector.load %arg4[%c6_89, %c0_90, %c0_91] : memref<8x64x5xf32, #tpu.memory_space<vmem>>, vector<1x64x5xf32>
    %224 = vector.shape_cast %223 : vector<1x64x5xf32> to vector<64x5xf32>
    %cst_92 = arith.constant dense<0.000000e+00> : vector<2x5xf32>
    %225 = tpu.matmul %177, %224, %cst_92 {dimension_numbers = #tpu.dot_dimension_numbers<[1], [0], [0], [1], [0, 0, 1, 1], [], []>} : vector<2x64xf32>, vector<64x5xf32>, vector<2x5xf32> -> vector<2x5xf32>
    %226 = arith.addf %222, %225 : vector<2x5xf32>
    %c7_93 = arith.constant 7 : index
    %c0_94 = arith.constant 0 : index
    %c0_95 = arith.constant 0 : index
    %227 = vector.load %arg4[%c7_93, %c0_94, %c0_95] : memref<8x64x5xf32, #tpu.memory_space<vmem>>, vector<1x64x5xf32>
    %228 = vector.shape_cast %227 : vector<1x64x5xf32> to vector<64x5xf32>
    %cst_96 = arith.constant dense<0.000000e+00> : vector<2x5xf32>
    %229 = tpu.matmul %197, %228, %cst_96 {dimension_numbers = #tpu.dot_dimension_numbers<[1], [0], [0], [1], [0, 0, 1, 1], [], []>} : vector<2x64xf32>, vector<64x5xf32>, vector<2x5xf32> -> vector<2x5xf32>
    %230 = arith.addf %226, %229 : vector<2x5xf32>
    %c0_97 = arith.constant 0 : index
    %c0_98 = arith.constant 0 : index
    %231 = vector.load %arg5[%c0_97, %c0_98] : memref<1x5xf32, #tpu.memory_space<vmem>>, vector<1x5xf32>
    %232 = vector.broadcast %231 : vector<1x5xf32> to vector<2x5xf32>
    %233 = arith.addf %230, %232 : vector<2x5xf32>
    %c0_99 = arith.constant 0 : index
    %c0_100 = arith.constant 0 : index
    %234 = vector.load %arg6[%c0_99, %c0_100] : memref<2x5xf32, #tpu.memory_space<vmem>>, vector<2x5xf32>
    tpu.vector_store %arg6[%c0_99, %c0_100], %233 {strides = array<i32>} : memref<2x5xf32, #tpu.memory_space<vmem>>, vector<2x5xf32>,
    return
  }
}

</mosaic_0001>

<llo_original>
// kernel: tpu_custom_call.1
$region0: #{tpu_custom_call.1}
  #allocation0 [shape = 'u32[]', space=smem, size = 0x4, offset = 0x4, fixed_abs, tag = 'smem constant byte address 0x4 - core index']
  #allocation1 [shape = 'u32[144,128]{1,0:T(1,128)}', space=vmem, size = 0x12000, scoped, tag = 'internal scratch']
  #allocation2 [shape = 'f32[8,2,256]{2,1,0:T(2,128)}', space=vmem, size = 0x4000, scoped, tag = 'scratch operand']
  %s0 = inlined_call_operand.vmem [shape: f32[16,8], index: 0, kind: input, shape index: {}]
  %s1 = inlined_call_operand.vmem [shape: f32[8,256], index: 1, kind: input, shape index: {}]
  %s2 = inlined_call_operand.vmem [shape: f32[64,256], index: 2, kind: input, shape index: {}]
  %s3 = inlined_call_operand.vmem [shape: f32[1,256], index: 3, kind: input, shape index: {}]
  %s4 = inlined_call_operand.vmem [shape: f32[8,64,5], index: 4, kind: input, shape index: {}]
  %s5 = inlined_call_operand.vmem [shape: f32[1,5], index: 5, kind: input, shape index: {}]
  %s6 = inlined_call_operand.hbm [shape: f32[2,5], index: 6, kind: output, shape index: {}]
  %s7 = sld [smem:[#allocation0]]
  $region34: #{tpu_custom_call.1} parent=0
    _
  %s9 = ssub.s32 1, %s7
  %s10 = scalar_select 0, %s9, %s7
  $region1: #{tpu_custom_call.1} parent=0
    #allocation3 [shape = 'u8[1024]{0}', space=vmem, size = 0x400, scoped, tag = 'output window, operand 0, single buffered']
    #allocation4 [shape = 's32[1]{0}', space=sflag, size = 0x4, scoped, tag = 'scoped memory for tpu_custom_call.1']
    %11 = vsyncpa [#allocation4], 0
    // Predicated region
    $region2: #{tpu_custom_call.1} parent=1 // pred_check
      _
    $region3: #{tpu_custom_call.1} parent=1 // pred_check_branch
      %13 = sbr.rel (0) target = $region5
    $region4: #{tpu_custom_call.1} parent=1 // pred_region
      _
    $region5: #{tpu_custom_call.1} parent=1 // pred_fallthru
      _
    // Predicated region
    $region6: #{tpu_custom_call.1} parent=1 // pred_check
      _
    $region7: #{tpu_custom_call.1} parent=1 // pred_check_branch
      %15 = sbr.rel (0) target = $region9
    $region8: #{tpu_custom_call.1} parent=1 // pred_region
      _
    $region9: #{tpu_custom_call.1} parent=1 // pred_fallthru
      _
    // Predicated region
    $region10: #{tpu_custom_call.1} parent=1 // pred_check
      _
    $region11: #{tpu_custom_call.1} parent=1 // pred_check_branch
      %17 = sbr.rel (0) target = $region13
    $region12: #{tpu_custom_call.1} parent=1 // pred_region
      _
    $region13: #{tpu_custom_call.1} parent=1 // pred_fallthru
      _
    // Predicated region
    $region14: #{tpu_custom_call.1} parent=1 // pred_check
      _
    $region15: #{tpu_custom_call.1} parent=1 // pred_check_branch
      %19 = sbr.rel (0) target = $region17
    $region16: #{tpu_custom_call.1} parent=1 // pred_region
      _
    $region17: #{tpu_custom_call.1} parent=1 // pred_fallthru
      _
    // Predicated region
    $region18: #{tpu_custom_call.1} parent=1 // pred_check
      _
    $region19: #{tpu_custom_call.1} parent=1 // pred_check_branch
      %21 = sbr.rel (0) target = $region21
    $region20: #{tpu_custom_call.1} parent=1 // pred_region
      _
    $region21: #{tpu_custom_call.1} parent=1 // pred_fallthru
      _
    // Predicated region
    $region22: #{tpu_custom_call.1} parent=1 // pred_check
      _
    $region23: #{tpu_custom_call.1} parent=1 // pred_check_branch
      %23 = sbr.rel (0) target = $region25
    $region24: #{tpu_custom_call.1} parent=1 // pred_region
      _
    $region25: #{tpu_custom_call.1} parent=1 // pred_fallthru
      _
    %v24 = vld [vmem:[%s0] sm:$0xff]
    %v25 = vld [vmem:[%s0 + $0x8] sm:$0xff]
    %v26 = vld [vmem:[%s1] sm:$0xff]
    %v27 = vld [vmem:[%s1 + $0x8] sm:$0xff]
    %v28 = vld [vmem:[%s3] sm:$0x3]
    %v30 = vlaneseq
    %v31 = vshrl.u32 %v30, 7
    %v32 = vsub.s32 0, %v31
    %v33 = vrot.slane %v28, %v32
    %v34 = vlaneseq
    %v35 = vshrl.u32 %v34, 7
    %v36 = vsub.s32 1, %v35
    %v37 = vrot.slane %v28, %v36
    %vm40 = vcmask 64512
    %v42 = vsel %vm40, %v24, 0
    %v45 = vsel %vm40, %v25, 0
    %47 = vmatprep.subr.mxu0 0.0
    %48 = vmatpush1.msra.mxu0 0.0
    %49 = vmatprep.subr.mxu0 0.0
    %50 = vmatpush1.msra.mxu0 0.0
    %51 = vmatprep.subr.mxu0 0.0
    %52 = vmatpush1.msra.mxu0 0.0
    %53 = vmatprep.subr.mxu0 0.0
    %54 = vmatpush1.msra.mxu0 0.0
    %55 = vmatprep.subr.mxu0 0.0
    %56 = vmatpush1.msra.mxu0 0.0
    %57 = vmatprep.subr.mxu0 0.0
    %58 = vmatpush1.msra.mxu0 0.0
    %59 = vmatprep.subr.mxu0 0.0
    %60 = vmatpush1.msra.mxu0 0.0
    %61 = vmatprep.subr.mxu0 0.0
    %62 = vmatpush1.msra.mxu0 0.0
    %63 = vmatprep.subr.mxu0 0.0
    %64 = vmatpush1.msra.mxu0 0.0
    %65 = vmatprep.subr.mxu0 0.0
    %66 = vmatpush1.msra.mxu0 0.0
    %67 = vmatprep.subr.mxu0 0.0
    %68 = vmatpush1.msra.mxu0 0.0
    %69 = vmatprep.subr.mxu0 0.0
    %70 = vmatpush1.msra.mxu0 0.0
    %71 = vmatprep.subr.mxu0 0.0
    %72 = vmatpush1.msra.mxu0 0.0
    %73 = vmatprep.subr.mxu0 0.0
    %74 = vmatpush1.msra.mxu0 0.0
    %75 = vmatprep.subr.mxu0 0.0
    %76 = vmatpush1.msra.mxu0 0.0
    %77 = vmatprep.subr.mxu0 %v27
    %78 = vmatpush1.msra.mxu0 %v26
    %79 = vmatprep.subr.mxu0 0.0
    %80 = vmatpush2.msra.mxu0 0.0
    %81 = vmatprep.subr.mxu0 0.0
    %82 = vmatpush2.msra.mxu0 0.0
    %83 = vmatprep.subr.mxu0 0.0
    %84 = vmatpush2.msra.mxu0 0.0
    %85 = vmatprep.subr.mxu0 0.0
    %86 = vmatpush2.msra.mxu0 0.0
    %87 = vmatprep.subr.mxu0 0.0
    %88 = vmatpush2.msra.mxu0 0.0
    %89 = vmatprep.subr.mxu0 0.0
    %90 = vmatpush2.msra.mxu0 0.0
    %91 = vmatprep.subr.mxu0 0.0
    %92 = vmatpush2.msra.mxu0 0.0
    %93 = vmatprep.subr.mxu0 0.0
    %94 = vmatpush2.msra.mxu0 0.0
    %95 = vmatprep.subr.mxu0 0.0
    %96 = vmatpush2.msra.mxu0 0.0
    %97 = vmatprep.subr.mxu0 0.0
    %98 = vmatpush2.msra.mxu0 0.0
    %99 = vmatprep.subr.mxu0 0.0
    %100 = vmatpush2.msra.mxu0 0.0
    %101 = vmatprep.subr.mxu0 0.0
    %102 = vmatpush2.msra.mxu0 0.0
    %103 = vmatprep.subr.mxu0 0.0
    %104 = vmatpush2.msra.mxu0 0.0
    %105 = vmatprep.subr.mxu0 0.0
    %106 = vmatpush2.msra.mxu0 0.0
    %107 = vmatprep.subr.mxu0 0.0
    %108 = vmatpush2.msra.mxu0 0.0
    %109 = vmatprep.subr.mxu0 0.0
    %110 = vmatpush2.msra.mxu0 0.0
    %111 = vmatprep.mubr.f32.mxu0 0.0
    %112 = vmatmul.mubr.f32.gmra.mxu0 %v42
    %v113 = vpop.f32.mrf.mxu0
    %v114 = vadd.f32 %v33, %v113
    %v115 = vpop.f32.mrf.mxu0
    %v116 = vadd.f32 %v37, %v115
    %117 = vmatprep.mubr.f32.mxu0 0.0
    %118 = vmatmul.mubr.f32.gmra.mxu0 %v45
    %v119 = vpop.f32.mrf.mxu0
    %v120 = vadd.f32 %v33, %v119
    %v121 = vpop.f32.mrf.mxu0
    %v122 = vadd.f32 %v37, %v121
    %123 = vdwg.mxu0
    %v126 = vcombine.low %v114, %v116
    %v128 = vunpack.c.l.s4 1983009808
    %v129 = vunpack.c.0.s8 %v128
    %v130 = vlaneseq
    %v131 = vshrl.u32 %v130, 7
    %v132 = vsub.s32 %v129, %v131
    %v133 = vrot.slane %v126, %v132
    %135 = vst [vmem:[#allocation2] sm:$0xf] %v133
    %v136 = vcombine.high %v133, %v133
    %s138 = scalar_lea.vmem [#allocation2], 4
    %139 = vst [vmem:[%s138] sm:$0xf] %v136
    %v140 = vcombine.high %v114, %v116
    %v142 = vunpack.c.l.s4 1983009808
    %v143 = vunpack.c.0.s8 %v142
    %v144 = vlaneseq
    %v145 = vshrl.u32 %v144, 7
    %v146 = vsub.s32 %v143, %v145
    %v147 = vrot.slane %v140, %v146
    %s149 = scalar_lea.vmem [#allocation2], 8
    %150 = vst [vmem:[%s149] sm:$0xf] %v147
    %v151 = vcombine.high %v147, %v147
    %s153 = scalar_lea.vmem [#allocation2], 12
    %154 = vst [vmem:[%s153] sm:$0xf] %v151
    %v157 = vcombine.low %v120, %v122
    %v159 = vunpack.c.l.s4 1983009808
    %v160 = vunpack.c.0.s8 %v159
    %v161 = vlaneseq
    %v162 = vshrl.u32 %v161, 7
    %v163 = vsub.s32 %v160, %v162
    %v164 = vrot.slane %v157, %v163
    %s166 = scalar_lea.vmem [#allocation2], 16
    %167 = vst [vmem:[%s166] sm:$0xf] %v164
    %v168 = vcombine.high %v164, %v164
    %s170 = scalar_lea.vmem [#allocation2], 20
    %171 = vst [vmem:[%s170] sm:$0xf] %v168
    %v172 = vcombine.high %v120, %v122
    %v174 = vunpack.c.l.s4 1983009808
    %v175 = vunpack.c.0.s8 %v174
    %v176 = vlaneseq
    %v177 = vshrl.u32 %v176, 7
    %v178 = vsub.s32 %v175, %v177
    %v179 = vrot.slane %v172, %v178
    %s181 = scalar_lea.vmem [#allocation2], 24
    %182 = vst [vmem:[%s181] sm:$0xf] %v179
    %v183 = vcombine.high %v179, %v179
    %s185 = scalar_lea.vmem [#allocation2], 28
    %186 = vst [vmem:[%s185] sm:$0xf] %v183
    %v187 = vld [vmem:[%s2] sm:$0xff]
    %v188 = vld [vmem:[%s2 + $0x8] sm:$0xff]
    %v189 = vld [vmem:[%s2 + $0x10] sm:$0xff]
    %v190 = vld [vmem:[%s2 + $0x18] sm:$0xff]
    %v191 = vld [vmem:[%s2 + $0x20] sm:$0xff]
    %v192 = vld [vmem:[%s2 + $0x28] sm:$0xff]
    %v193 = vld [vmem:[%s2 + $0x30] sm:$0xff]
    %v194 = vld [vmem:[%s2 + $0x38] sm:$0xff]
    %v195 = vld [vmem:[%s2 + $0x40] sm:$0xff]
    %v196 = vld [vmem:[%s2 + $0x48] sm:$0xff]
    %v197 = vld [vmem:[%s2 + $0x50] sm:$0xff]
    %v198 = vld [vmem:[%s2 + $0x58] sm:$0xff]
    %v199 = vld [vmem:[%s2 + $0x60] sm:$0xff]
    %v200 = vld [vmem:[%s2 + $0x68] sm:$0xff]
    %v201 = vld [vmem:[%s2 + $0x70] sm:$0xff]
    %v202 = vld [vmem:[%s2 + $0x78] sm:$0xff]
    %v203 = vld [vmem:[#allocation2] sm:$0xf]
    %v204 = vxor.u32 %v203, 2147483648
    %v205 = vmul.f32 %v204, 1.442695
    %v206 = vpow.pop %v205
    %v207 = vadd.f32 %v206, 1.0
    %v208 = vrcp.pop %v207
    %v209 = vmul.f32 1.0, %v208
    %211 = vrot.lane.b32.xlu0 %v203, 64
    %v212 = vpop.permute.xlu0 %211
    %v213 = vrot.slane %v212, 2
    %v215 = vtanh.pop %v213
    %v216 = vmul.f32 %v209, 0.0
    %v217 = vmul.f32 %v209, %v215
    %219 = vrot.lane.b32.xlu0 %v217, 64
    %v220 = vpop.permute.xlu0 %219
    %v222 = vadd.f32 %v216, %v220
    %v223 = vtanh.pop %v222
    %v225 = vrot.slane %v209, 2
    %228 = vrot.lane.b32.xlu0 %v223, 64
    %v229 = vpop.permute.xlu0 %228
    %v231 = vmul.f32 %v225, %v229
    %v232 = vld [vmem:[%s138] sm:$0xf]
    %vm233 = vcmask 523264
    %v235 = vsel %vm233, %v231, 0
    %237 = vmatprep.subr.mxu0 0.0
    %238 = vmatpush1.msra.mxu0 0.0
    %239 = vmatprep.subr.mxu0 0.0
    %240 = vmatpush1.msra.mxu0 0.0
    %241 = vmatprep.subr.mxu0 0.0
    %242 = vmatpush1.msra.mxu0 0.0
    %243 = vmatprep.subr.mxu0 0.0
    %244 = vmatpush1.msra.mxu0 0.0
    %245 = vmatprep.subr.mxu0 0.0
    %246 = vmatpush1.msra.mxu0 0.0
    %247 = vmatprep.subr.mxu0 0.0
    %248 = vmatpush1.msra.mxu0 0.0
    %249 = vmatprep.subr.mxu0 0.0
    %250 = vmatpush1.msra.mxu0 0.0
    %251 = vmatprep.subr.mxu0 0.0
    %252 = vmatpush1.msra.mxu0 0.0
    %253 = vmatprep.subr.mxu0 %v202
    %254 = vmatpush1.msra.mxu0 %v201
    %255 = vmatprep.subr.mxu0 %v200
    %256 = vmatpush1.msra.mxu0 %v199
    %257 = vmatprep.subr.mxu0 %v198
    %258 = vmatpush1.msra.mxu0 %v197
    %259 = vmatprep.subr.mxu0 %v196
    %260 = vmatpush1.msra.mxu0 %v195
    %261 = vmatprep.subr.mxu0 %v194
    %262 = vmatpush1.msra.mxu0 %v193
    %263 = vmatprep.subr.mxu0 %v192
    %264 = vmatpush1.msra.mxu0 %v191
    %265 = vmatprep.subr.mxu0 %v190
    %266 = vmatpush1.msra.mxu0 %v189
    %267 = vmatprep.subr.mxu0 %v188
    %268 = vmatpush1.msra.mxu0 %v187
    %269 = vmatprep.subr.mxu0 0.0
    %270 = vmatpush2.msra.mxu0 0.0
    %271 = vmatprep.subr.mxu0 0.0
    %272 = vmatpush2.msra.mxu0 0.0
    %273 = vmatprep.subr.mxu0 0.0
    %274 = vmatpush2.msra.mxu0 0.0
    %275 = vmatprep.subr.mxu0 0.0
    %276 = vmatpush2.msra.mxu0 0.0
    %277 = vmatprep.subr.mxu0 0.0
    %278 = vmatpush2.msra.mxu0 0.0
    %279 = vmatprep.subr.mxu0 0.0
    %280 = vmatpush2.msra.mxu0 0.0
    %281 = vmatprep.subr.mxu0 0.0
    %282 = vmatpush2.msra.mxu0 0.0
    %283 = vmatprep.subr.mxu0 0.0
    %284 = vmatpush2.msra.mxu0 0.0
    %285 = vmatprep.subr.mxu0 0.0
    %286 = vmatpush2.msra.mxu0 0.0
    %287 = vmatprep.subr.mxu0 0.0
    %288 = vmatpush2.msra.mxu0 0.0
    %289 = vmatprep.subr.mxu0 0.0
    %290 = vmatpush2.msra.mxu0 0.0
    %291 = vmatprep.subr.mxu0 0.0
    %292 = vmatpush2.msra.mxu0 0.0
    %293 = vmatprep.subr.mxu0 0.0
    %294 = vmatpush2.msra.mxu0 0.0
    %295 = vmatprep.subr.mxu0 0.0
    %296 = vmatpush2.msra.mxu0 0.0
    %297 = vmatprep.subr.mxu0 0.0
    %298 = vmatpush2.msra.mxu0 0.0
    %299 = vmatprep.subr.mxu0 0.0
    %300 = vmatpush2.msra.mxu0 0.0
    %301 = vmatprep.mubr.f32.mxu0 0.0
    %302 = vmatmul.mubr.f32.gmra.mxu0 %v235
    %v303 = vpop.f32.mrf.mxu0
    %v304 = vadd.f32 0.0, %v303
    %v305 = vpop.f32.mrf.mxu0
    %v306 = vadd.f32 0.0, %v305
    %307 = vdwg.mxu0
    %v310 = vcombine.low %v304, %v306
    %v312 = vunpack.c.l.s4 1983009808
    %v313 = vunpack.c.0.s8 %v312
    %v314 = vlaneseq
    %v315 = vshrl.u32 %v314, 7
    %v316 = vsub.s32 %v313, %v315
    %v317 = vrot.slane %v310, %v316
    %v319 = vadd.f32 %v232, %v317
    %v320 = vxor.u32 %v319, 2147483648
    %v321 = vmul.f32 %v320, 1.442695
    %v322 = vpow.pop %v321
    %v323 = vadd.f32 %v322, 1.0
    %v324 = vrcp.pop %v323
    %v325 = vmul.f32 1.0, %v324
    %327 = vrot.lane.b32.xlu0 %v319, 64
    %v328 = vpop.permute.xlu0 %327
    %v329 = vrot.slane %v328, 2
    %v331 = vtanh.pop %v329
    %v332 = vmul.f32 %v325, %v222
    %v333 = vmul.f32 %v325, %v331
    %335 = vrot.lane.b32.xlu0 %v333, 64
    %v336 = vpop.permute.xlu0 %335
    %v338 = vadd.f32 %v332, %v336
    %v339 = vtanh.pop %v338
    %v341 = vrot.slane %v325, 2
    %344 = vrot.lane.b32.xlu0 %v339, 64
    %v345 = vpop.permute.xlu0 %344
    %v347 = vmul.f32 %v341, %v345
    %v348 = vld [vmem:[%s149] sm:$0xf]
    %v350 = vsel %vm233, %v347, 0
    %352 = vmatprep.subr.mxu0 0.0
    %353 = vmatpush1.msra.mxu0 0.0
    %354 = vmatprep.subr.mxu0 0.0
    %355 = vmatpush1.msra.mxu0 0.0
    %356 = vmatprep.subr.mxu0 0.0
    %357 = vmatpush1.msra.mxu0 0.0
    %358 = vmatprep.subr.mxu0 0.0
    %359 = vmatpush1.msra.mxu0 0.0
    %360 = vmatprep.subr.mxu0 0.0
    %361 = vmatpush1.msra.mxu0 0.0
    %362 = vmatprep.subr.mxu0 0.0
    %363 = vmatpush1.msra.mxu0 0.0
    %364 = vmatprep.subr.mxu0 0.0
    %365 = vmatpush1.msra.mxu0 0.0
    %366 = vmatprep.subr.mxu0 0.0
    %367 = vmatpush1.msra.mxu0 0.0
    %368 = vmatprep.subr.mxu0 %v202
    %369 = vmatpush1.msra.mxu0 %v201
    %370 = vmatprep.subr.mxu0 %v200
    %371 = vmatpush1.msra.mxu0 %v199
    %372 = vmatprep.subr.mxu0 %v198
    %373 = vmatpush1.msra.mxu0 %v197
    %374 = vmatprep.subr.mxu0 %v196
    %375 = vmatpush1.msra.mxu0 %v195
    %376 = vmatprep.subr.mxu0 %v194
    %377 = vmatpush1.msra.mxu0 %v193
    %378 = vmatprep.subr.mxu0 %v192
    %379 = vmatpush1.msra.mxu0 %v191
    %380 = vmatprep.subr.mxu0 %v190
    %381 = vmatpush1.msra.mxu0 %v189
    %382 = vmatprep.subr.mxu0 %v188
    %383 = vmatpush1.msra.mxu0 %v187
    %384 = vmatprep.subr.mxu0 0.0
    %385 = vmatpush2.msra.mxu0 0.0
    %386 = vmatprep.subr.mxu0 0.0
    %387 = vmatpush2.msra.mxu0 0.0
    %388 = vmatprep.subr.mxu0 0.0
    %389 = vmatpush2.msra.mxu0 0.0
    %390 = vmatprep.subr.mxu0 0.0
    %391 = vmatpush2.msra.mxu0 0.0
    %392 = vmatprep.subr.mxu0 0.0
    %393 = vmatpush2.msra.mxu0 0.0
    %394 = vmatprep.subr.mxu0 0.0
    %395 = vmatpush2.msra.mxu0 0.0
    %396 = vmatprep.subr.mxu0 0.0
    %397 = vmatpush2.msra.mxu0 0.0
    %398 = vmatprep.subr.mxu0 0.0
    %399 = vmatpush2.msra.mxu0 0.0
    %400 = vmatprep.subr.mxu0 0.0
    %401 = vmatpush2.msra.mxu0 0.0
    %402 = vmatprep.subr.mxu0 0.0
    %403 = vmatpush2.msra.mxu0 0.0
    %404 = vmatprep.subr.mxu0 0.0
    %405 = vmatpush2.msra.mxu0 0.0
    %406 = vmatprep.subr.mxu0 0.0
    %407 = vmatpush2.msra.mxu0 0.0
    %408 = vmatprep.subr.mxu0 0.0
    %409 = vmatpush2.msra.mxu0 0.0
    %410 = vmatprep.subr.mxu0 0.0
    %411 = vmatpush2.msra.mxu0 0.0
    %412 = vmatprep.subr.mxu0 0.0
    %413 = vmatpush2.msra.mxu0 0.0
    %414 = vmatprep.subr.mxu0 0.0
    %415 = vmatpush2.msra.mxu0 0.0
    %416 = vmatprep.mubr.f32.mxu0 0.0
    %417 = vmatmul.mubr.f32.gmra.mxu0 %v350
    %v418 = vpop.f32.mrf.mxu0
    %v419 = vadd.f32 0.0, %v418
    %v420 = vpop.f32.mrf.mxu0
    %v421 = vadd.f32 0.0, %v420
    %422 = vdwg.mxu0
    %v425 = vcombine.low %v419, %v421
    %v427 = vunpack.c.l.s4 1983009808
    %v428 = vunpack.c.0.s8 %v427
    %v429 = vlaneseq
    %v430 = vshrl.u32 %v429, 7
    %v431 = vsub.s32 %v428, %v430
    %v432 = vrot.slane %v425, %v431
    %v434 = vadd.f32 %v348, %v432
    %v435 = vxor.u32 %v434, 2147483648
    %v436 = vmul.f32 %v435, 1.442695
    %v437 = vpow.pop %v436
    %v438 = vadd.f32 %v437, 1.0
    %v439 = vrcp.pop %v438
    %v440 = vmul.f32 1.0, %v439
    %442 = vrot.lane.b32.xlu0 %v434, 64
    %v443 = vpop.permute.xlu0 %442
    %v444 = vrot.slane %v443, 2
    %v446 = vtanh.pop %v444
    %v447 = vmul.f32 %v440, %v338
    %v448 = vmul.f32 %v440, %v446
    %450 = vrot.lane.b32.xlu0 %v448, 64
    %v451 = vpop.permute.xlu0 %450
    %v453 = vadd.f32 %v447, %v451
    %v454 = vtanh.pop %v453
    %v456 = vrot.slane %v440, 2
    %459 = vrot.lane.b32.xlu0 %v454, 64
    %v460 = vpop.permute.xlu0 %459
    %v462 = vmul.f32 %v456, %v460
    %v463 = vld [vmem:[%s153] sm:$0xf]
    %v465 = vsel %vm233, %v462, 0
    %467 = vmatprep.subr.mxu0 0.0
    %468 = vmatpush1.msra.mxu0 0.0
    %469 = vmatprep.subr.mxu0 0.0
    %470 = vmatpush1.msra.mxu0 0.0
    %471 = vmatprep.subr.mxu0 0.0
    %472 = vmatpush1.msra.mxu0 0.0
    %473 = vmatprep.subr.mxu0 0.0
    %474 = vmatpush1.msra.mxu0 0.0
    %475 = vmatprep.subr.mxu0 0.0
    %476 = vmatpush1.msra.mxu0 0.0
    %477 = vmatprep.subr.mxu0 0.0
    %478 = vmatpush1.msra.mxu0 0.0
    %479 = vmatprep.subr.mxu0 0.0
    %480 = vmatpush1.msra.mxu0 0.0
    %481 = vmatprep.subr.mxu0 0.0
    %482 = vmatpush1.msra.mxu0 0.0
    %483 = vmatprep.subr.mxu0 %v202
    %484 = vmatpush1.msra.mxu0 %v201
    %485 = vmatprep.subr.mxu0 %v200
    %486 = vmatpush1.msra.mxu0 %v199
    %487 = vmatprep.subr.mxu0 %v198
    %488 = vmatpush1.msra.mxu0 %v197
    %489 = vmatprep.subr.mxu0 %v196
    %490 = vmatpush1.msra.mxu0 %v195
    %491 = vmatprep.subr.mxu0 %v194
    %492 = vmatpush1.msra.mxu0 %v193
    %493 = vmatprep.subr.mxu0 %v192
    %494 = vmatpush1.msra.mxu0 %v191
    %495 = vmatprep.subr.mxu0 %v190
    %496 = vmatpush1.msra.mxu0 %v189
    %497 = vmatprep.subr.mxu0 %v188
    %498 = vmatpush1.msra.mxu0 %v187
    %499 = vmatprep.subr.mxu0 0.0
    %500 = vmatpush2.msra.mxu0 0.0
    %501 = vmatprep.subr.mxu0 0.0
    %502 = vmatpush2.msra.mxu0 0.0
    %503 = vmatprep.subr.mxu0 0.0
    %504 = vmatpush2.msra.mxu0 0.0
    %505 = vmatprep.subr.mxu0 0.0
    %506 = vmatpush2.msra.mxu0 0.0
    %507 = vmatprep.subr.mxu0 0.0
    %508 = vmatpush2.msra.mxu0 0.0
    %509 = vmatprep.subr.mxu0 0.0
    %510 = vmatpush2.msra.mxu0 0.0
    %511 = vmatprep.subr.mxu0 0.0
    %512 = vmatpush2.msra.mxu0 0.0
    %513 = vmatprep.subr.mxu0 0.0
    %514 = vmatpush2.msra.mxu0 0.0
    %515 = vmatprep.subr.mxu0 0.0
    %516 = vmatpush2.msra.mxu0 0.0
    %517 = vmatprep.subr.mxu0 0.0
    %518 = vmatpush2.msra.mxu0 0.0
    %519 = vmatprep.subr.mxu0 0.0
    %520 = vmatpush2.msra.mxu0 0.0
    %521 = vmatprep.subr.mxu0 0.0
    %522 = vmatpush2.msra.mxu0 0.0
    %523 = vmatprep.subr.mxu0 0.0
    %524 = vmatpush2.msra.mxu0 0.0
    %525 = vmatprep.subr.mxu0 0.0
    %526 = vmatpush2.msra.mxu0 0.0
    %527 = vmatprep.subr.mxu0 0.0
    %528 = vmatpush2.msra.mxu0 0.0
    %529 = vmatprep.subr.mxu0 0.0
    %530 = vmatpush2.msra.mxu0 0.0
    %531 = vmatprep.mubr.f32.mxu0 0.0
    %532 = vmatmul.mubr.f32.gmra.mxu0 %v465
    %v533 = vpop.f32.mrf.mxu0
    %v534 = vadd.f32 0.0, %v533
    %v535 = vpop.f32.mrf.mxu0
    %v536 = vadd.f32 0.0, %v535
    %537 = vdwg.mxu0
    %v540 = vcombine.low %v534, %v536
    %v542 = vunpack.c.l.s4 1983009808
    %v543 = vunpack.c.0.s8 %v542
    %v544 = vlaneseq
    %v545 = vshrl.u32 %v544, 7
    %v546 = vsub.s32 %v543, %v545
    %v547 = vrot.slane %v540, %v546
    %v549 = vadd.f32 %v463, %v547
    %v550 = vxor.u32 %v549, 2147483648
    %v551 = vmul.f32 %v550, 1.442695
    %v552 = vpow.pop %v551
    %v553 = vadd.f32 %v552, 1.0
    %v554 = vrcp.pop %v553
    %v555 = vmul.f32 1.0, %v554
    %557 = vrot.lane.b32.xlu0 %v549, 64
    %v558 = vpop.permute.xlu0 %557
    %v559 = vrot.slane %v558, 2
    %v561 = vtanh.pop %v559
    %v562 = vmul.f32 %v555, %v453
    %v563 = vmul.f32 %v555, %v561
    %565 = vrot.lane.b32.xlu0 %v563, 64
    %v566 = vpop.permute.xlu0 %565
    %v568 = vadd.f32 %v562, %v566
    %v569 = vtanh.pop %v568
    %v571 = vrot.slane %v555, 2
    %574 = vrot.lane.b32.xlu0 %v569, 64
    %v575 = vpop.permute.xlu0 %574
    %v577 = vmul.f32 %v571, %v575
    %v578 = vld [vmem:[%s166] sm:$0xf]
    %v580 = vsel %vm233, %v577, 0
    %582 = vmatprep.subr.mxu0 0.0
    %583 = vmatpush1.msra.mxu0 0.0
    %584 = vmatprep.subr.mxu0 0.0
    %585 = vmatpush1.msra.mxu0 0.0
    %586 = vmatprep.subr.mxu0 0.0
    %587 = vmatpush1.msra.mxu0 0.0
    %588 = vmatprep.subr.mxu0 0.0
    %589 = vmatpush1.msra.mxu0 0.0
    %590 = vmatprep.subr.mxu0 0.0
    %591 = vmatpush1.msra.mxu0 0.0
    %592 = vmatprep.subr.mxu0 0.0
    %593 = vmatpush1.msra.mxu0 0.0
    %594 = vmatprep.subr.mxu0 0.0
    %595 = vmatpush1.msra.mxu0 0.0
    %596 = vmatprep.subr.mxu0 0.0
    %597 = vmatpush1.msra.mxu0 0.0
    %598 = vmatprep.subr.mxu0 %v202
    %599 = vmatpush1.msra.mxu0 %v201
    %600 = vmatprep.subr.mxu0 %v200
    %601 = vmatpush1.msra.mxu0 %v199
    %602 = vmatprep.subr.mxu0 %v198
    %603 = vmatpush1.msra.mxu0 %v197
    %604 = vmatprep.subr.mxu0 %v196
    %605 = vmatpush1.msra.mxu0 %v195
    %606 = vmatprep.subr.mxu0 %v194
    %607 = vmatpush1.msra.mxu0 %v193
    %608 = vmatprep.subr.mxu0 %v192
    %609 = vmatpush1.msra.mxu0 %v191
    %610 = vmatprep.subr.mxu0 %v190
    %611 = vmatpush1.msra.mxu0 %v189
    %612 = vmatprep.subr.mxu0 %v188
    %613 = vmatpush1.msra.mxu0 %v187
    %614 = vmatprep.subr.mxu0 0.0
    %615 = vmatpush2.msra.mxu0 0.0
    %616 = vmatprep.subr.mxu0 0.0
    %617 = vmatpush2.msra.mxu0 0.0
    %618 = vmatprep.subr.mxu0 0.0
    %619 = vmatpush2.msra.mxu0 0.0
    %620 = vmatprep.subr.mxu0 0.0
    %621 = vmatpush2.msra.mxu0 0.0
    %622 = vmatprep.subr.mxu0 0.0
    %623 = vmatpush2.msra.mxu0 0.0
    %624 = vmatprep.subr.mxu0 0.0
    %625 = vmatpush2.msra.mxu0 0.0
    %626 = vmatprep.subr.mxu0 0.0
    %627 = vmatpush2.msra.mxu0 0.0
    %628 = vmatprep.subr.mxu0 0.0
    %629 = vmatpush2.msra.mxu0 0.0
    %630 = vmatprep.subr.mxu0 0.0
    %631 = vmatpush2.msra.mxu0 0.0
    %632 = vmatprep.subr.mxu0 0.0
    %633 = vmatpush2.msra.mxu0 0.0
    %634 = vmatprep.subr.mxu0 0.0
    %635 = vmatpush2.msra.mxu0 0.0
    %636 = vmatprep.subr.mxu0 0.0
    %637 = vmatpush2.msra.mxu0 0.0
    %638 = vmatprep.subr.mxu0 0.0
    %639 = vmatpush2.msra.mxu0 0.0
    %640 = vmatprep.subr.mxu0 0.0
    %641 = vmatpush2.msra.mxu0 0.0
    %642 = vmatprep.subr.mxu0 0.0
    %643 = vmatpush2.msra.mxu0 0.0
    %644 = vmatprep.subr.mxu0 0.0
    %645 = vmatpush2.msra.mxu0 0.0
    %646 = vmatprep.mubr.f32.mxu0 0.0
    %647 = vmatmul.mubr.f32.gmra.mxu0 %v580
    %v648 = vpop.f32.mrf.mxu0
    %v649 = vadd.f32 0.0, %v648
    %v650 = vpop.f32.mrf.mxu0
    %v651 = vadd.f32 0.0, %v650
    %652 = vdwg.mxu0
    %v655 = vcombine.low %v649, %v651
    %v657 = vunpack.c.l.s4 1983009808
    %v658 = vunpack.c.0.s8 %v657
    %v659 = vlaneseq
    %v660 = vshrl.u32 %v659, 7
    %v661 = vsub.s32 %v658, %v660
    %v662 = vrot.slane %v655, %v661
    %v664 = vadd.f32 %v578, %v662
    %v665 = vxor.u32 %v664, 2147483648
    %v666 = vmul.f32 %v665, 1.442695
    %v667 = vpow.pop %v666
    %v668 = vadd.f32 %v667, 1.0
    %v669 = vrcp.pop %v668
    %v670 = vmul.f32 1.0, %v669
    %672 = vrot.lane.b32.xlu0 %v664, 64
    %v673 = vpop.permute.xlu0 %672
    %v674 = vrot.slane %v673, 2
    %v676 = vtanh.pop %v674
    %v677 = vmul.f32 %v670, %v568
    %v678 = vmul.f32 %v670, %v676
    %680 = vrot.lane.b32.xlu0 %v678, 64
    %v681 = vpop.permute.xlu0 %680
    %v683 = vadd.f32 %v677, %v681
    %v684 = vtanh.pop %v683
    %v686 = vrot.slane %v670, 2
    %689 = vrot.lane.b32.xlu0 %v684, 64
    %v690 = vpop.permute.xlu0 %689
    %v692 = vmul.f32 %v686, %v690
    %v693 = vld [vmem:[%s170] sm:$0xf]
    %v695 = vsel %vm233, %v692, 0
    %697 = vmatprep.subr.mxu0 0.0
    %698 = vmatpush1.msra.mxu0 0.0
    %699 = vmatprep.subr.mxu0 0.0
    %700 = vmatpush1.msra.mxu0 0.0
    %701 = vmatprep.subr.mxu0 0.0
    %702 = vmatpush1.msra.mxu0 0.0
    %703 = vmatprep.subr.mxu0 0.0
    %704 = vmatpush1.msra.mxu0 0.0
    %705 = vmatprep.subr.mxu0 0.0
    %706 = vmatpush1.msra.mxu0 0.0
    %707 = vmatprep.subr.mxu0 0.0
    %708 = vmatpush1.msra.mxu0 0.0
    %709 = vmatprep.subr.mxu0 0.0
    %710 = vmatpush1.msra.mxu0 0.0
    %711 = vmatprep.subr.mxu0 0.0
    %712 = vmatpush1.msra.mxu0 0.0
    %713 = vmatprep.subr.mxu0 %v202
    %714 = vmatpush1.msra.mxu0 %v201
    %715 = vmatprep.subr.mxu0 %v200
    %716 = vmatpush1.msra.mxu0 %v199
    %717 = vmatprep.subr.mxu0 %v198
    %718 = vmatpush1.msra.mxu0 %v197
    %719 = vmatprep.subr.mxu0 %v196
    %720 = vmatpush1.msra.mxu0 %v195
    %721 = vmatprep.subr.mxu0 %v194
    %722 = vmatpush1.msra.mxu0 %v193
    %723 = vmatprep.subr.mxu0 %v192
    %724 = vmatpush1.msra.mxu0 %v191
    %725 = vmatprep.subr.mxu0 %v190
    %726 = vmatpush1.msra.mxu0 %v189
    %727 = vmatprep.subr.mxu0 %v188
    %728 = vmatpush1.msra.mxu0 %v187
    %729 = vmatprep.subr.mxu0 0.0
    %730 = vmatpush2.msra.mxu0 0.0
    %731 = vmatprep.subr.mxu0 0.0
    %732 = vmatpush2.msra.mxu0 0.0
    %733 = vmatprep.subr.mxu0 0.0
    %734 = vmatpush2.msra.mxu0 0.0
    %735 = vmatprep.subr.mxu0 0.0
    %736 = vmatpush2.msra.mxu0 0.0
    %737 = vmatprep.subr.mxu0 0.0
    %738 = vmatpush2.msra.mxu0 0.0
    %739 = vmatprep.subr.mxu0 0.0
    %740 = vmatpush2.msra.mxu0 0.0
    %741 = vmatprep.subr.mxu0 0.0
    %742 = vmatpush2.msra.mxu0 0.0
    %743 = vmatprep.subr.mxu0 0.0
    %744 = vmatpush2.msra.mxu0 0.0
    %745 = vmatprep.subr.mxu0 0.0
    %746 = vmatpush2.msra.mxu0 0.0
    %747 = vmatprep.subr.mxu0 0.0
    %748 = vmatpush2.msra.mxu0 0.0
    %749 = vmatprep.subr.mxu0 0.0
    %750 = vmatpush2.msra.mxu0 0.0
    %751 = vmatprep.subr.mxu0 0.0
    %752 = vmatpush2.msra.mxu0 0.0
    %753 = vmatprep.subr.mxu0 0.0
    %754 = vmatpush2.msra.mxu0 0.0
    %755 = vmatprep.subr.mxu0 0.0
    %756 = vmatpush2.msra.mxu0 0.0
    %757 = vmatprep.subr.mxu0 0.0
    %758 = vmatpush2.msra.mxu0 0.0
    %759 = vmatprep.subr.mxu0 0.0
    %760 = vmatpush2.msra.mxu0 0.0
    %761 = vmatprep.mubr.f32.mxu0 0.0
    %762 = vmatmul.mubr.f32.gmra.mxu0 %v695
    %v763 = vpop.f32.mrf.mxu0
    %v764 = vadd.f32 0.0, %v763
    %v765 = vpop.f32.mrf.mxu0
    %v766 = vadd.f32 0.0, %v765
    %767 = vdwg.mxu0
    %v770 = vcombine.low %v764, %v766
    %v772 = vunpack.c.l.s4 1983009808
    %v773 = vunpack.c.0.s8 %v772
    %v774 = vlaneseq
    %v775 = vshrl.u32 %v774, 7
    %v776 = vsub.s32 %v773, %v775
    %v777 = vrot.slane %v770, %v776
    %v779 = vadd.f32 %v693, %v777
    %v780 = vxor.u32 %v779, 2147483648
    %v781 = vmul.f32 %v780, 1.442695
    %v782 = vpow.pop %v781
    %v783 = vadd.f32 %v782, 1.0
    %v784 = vrcp.pop %v783
    %v785 = vmul.f32 1.0, %v784
    %787 = vrot.lane.b32.xlu0 %v779, 64
    %v788 = vpop.permute.xlu0 %787
    %v789 = vrot.slane %v788, 2
    %v791 = vtanh.pop %v789
    %v792 = vmul.f32 %v785, %v683
    %v793 = vmul.f32 %v785, %v791
    %795 = vrot.lane.b32.xlu0 %v793, 64
    %v796 = vpop.permute.xlu0 %795
    %v798 = vadd.f32 %v792, %v796
    %v799 = vtanh.pop %v798
    %v801 = vrot.slane %v785, 2
    %804 = vrot.lane.b32.xlu0 %v799, 64
    %v805 = vpop.permute.xlu0 %804
    %v807 = vmul.f32 %v801, %v805
    %v808 = vld [vmem:[%s181] sm:$0xf]
    %v810 = vsel %vm233, %v807, 0
    %812 = vmatprep.subr.mxu0 0.0
    %813 = vmatpush1.msra.mxu0 0.0
    %814 = vmatprep.subr.mxu0 0.0
    %815 = vmatpush1.msra.mxu0 0.0
    %816 = vmatprep.subr.mxu0 0.0
    %817 = vmatpush1.msra.mxu0 0.0
    %818 = vmatprep.subr.mxu0 0.0
    %819 = vmatpush1.msra.mxu0 0.0
    %820 = vmatprep.subr.mxu0 0.0
    %821 = vmatpush1.msra.mxu0 0.0
    %822 = vmatprep.subr.mxu0 0.0
    %823 = vmatpush1.msra.mxu0 0.0
    %824 = vmatprep.subr.mxu0 0.0
    %825 = vmatpush1.msra.mxu0 0.0
    %826 = vmatprep.subr.mxu0 0.0
    %827 = vmatpush1.msra.mxu0 0.0
    %828 = vmatprep.subr.mxu0 %v202
    %829 = vmatpush1.msra.mxu0 %v201
    %830 = vmatprep.subr.mxu0 %v200
    %831 = vmatpush1.msra.mxu0 %v199
    %832 = vmatprep.subr.mxu0 %v198
    %833 = vmatpush1.msra.mxu0 %v197
    %834 = vmatprep.subr.mxu0 %v196
    %835 = vmatpush1.msra.mxu0 %v195
    %836 = vmatprep.subr.mxu0 %v194
    %837 = vmatpush1.msra.mxu0 %v193
    %838 = vmatprep.subr.mxu0 %v192
    %839 = vmatpush1.msra.mxu0 %v191
    %840 = vmatprep.subr.mxu0 %v190
    %841 = vmatpush1.msra.mxu0 %v189
    %842 = vmatprep.subr.mxu0 %v188
    %843 = vmatpush1.msra.mxu0 %v187
    %844 = vmatprep.subr.mxu0 0.0
    %845 = vmatpush2.msra.mxu0 0.0
    %846 = vmatprep.subr.mxu0 0.0
    %847 = vmatpush2.msra.mxu0 0.0
    %848 = vmatprep.subr.mxu0 0.0
    %849 = vmatpush2.msra.mxu0 0.0
    %850 = vmatprep.subr.mxu0 0.0
    %851 = vmatpush2.msra.mxu0 0.0
    %852 = vmatprep.subr.mxu0 0.0
    %853 = vmatpush2.msra.mxu0 0.0
    %854 = vmatprep.subr.mxu0 0.0
    %855 = vmatpush2.msra.mxu0 0.0
    %856 = vmatprep.subr.mxu0 0.0
    %857 = vmatpush2.msra.mxu0 0.0
    %858 = vmatprep.subr.mxu0 0.0
    %859 = vmatpush2.msra.mxu0 0.0
    %860 = vmatprep.subr.mxu0 0.0
    %861 = vmatpush2.msra.mxu0 0.0
    %862 = vmatprep.subr.mxu0 0.0
    %863 = vmatpush2.msra.mxu0 0.0
    %864 = vmatprep.subr.mxu0 0.0
    %865 = vmatpush2.msra.mxu0 0.0
    %866 = vmatprep.subr.mxu0 0.0
    %867 = vmatpush2.msra.mxu0 0.0
    %868 = vmatprep.subr.mxu0 0.0
    %869 = vmatpush2.msra.mxu0 0.0
    %870 = vmatprep.subr.mxu0 0.0
    %871 = vmatpush2.msra.mxu0 0.0
    %872 = vmatprep.subr.mxu0 0.0
    %873 = vmatpush2.msra.mxu0 0.0
    %874 = vmatprep.subr.mxu0 0.0
    %875 = vmatpush2.msra.mxu0 0.0
    %876 = vmatprep.mubr.f32.mxu0 0.0
    %877 = vmatmul.mubr.f32.gmra.mxu0 %v810
    %v878 = vpop.f32.mrf.mxu0
    %v879 = vadd.f32 0.0, %v878
    %v880 = vpop.f32.mrf.mxu0
    %v881 = vadd.f32 0.0, %v880
    %882 = vdwg.mxu0
    %v885 = vcombine.low %v879, %v881
    %v887 = vunpack.c.l.s4 1983009808
    %v888 = vunpack.c.0.s8 %v887
    %v889 = vlaneseq
    %v890 = vshrl.u32 %v889, 7
    %v891 = vsub.s32 %v888, %v890
    %v892 = vrot.slane %v885, %v891
    %v894 = vadd.f32 %v808, %v892
    %v895 = vxor.u32 %v894, 2147483648
    %v896 = vmul.f32 %v895, 1.442695
    %v897 = vpow.pop %v896
    %v898 = vadd.f32 %v897, 1.0
    %v899 = vrcp.pop %v898
    %v900 = vmul.f32 1.0, %v899
    %902 = vrot.lane.b32.xlu0 %v894, 64
    %v903 = vpop.permute.xlu0 %902
    %v904 = vrot.slane %v903, 2
    %v906 = vtanh.pop %v904
    %v907 = vmul.f32 %v900, %v798
    %v908 = vmul.f32 %v900, %v906
    %910 = vrot.lane.b32.xlu0 %v908, 64
    %v911 = vpop.permute.xlu0 %910
    %v913 = vadd.f32 %v907, %v911
    %v914 = vtanh.pop %v913
    %v916 = vrot.slane %v900, 2
    %919 = vrot.lane.b32.xlu0 %v914, 64
    %v920 = vpop.permute.xlu0 %919
    %v922 = vmul.f32 %v916, %v920
    %v923 = vld [vmem:[%s185] sm:$0xf]
    %v925 = vsel %vm233, %v922, 0
    %927 = vmatprep.subr.mxu0 0.0
    %928 = vmatpush1.msra.mxu0 0.0
    %929 = vmatprep.subr.mxu0 0.0
    %930 = vmatpush1.msra.mxu0 0.0
    %931 = vmatprep.subr.mxu0 0.0
    %932 = vmatpush1.msra.mxu0 0.0
    %933 = vmatprep.subr.mxu0 0.0
    %934 = vmatpush1.msra.mxu0 0.0
    %935 = vmatprep.subr.mxu0 0.0
    %936 = vmatpush1.msra.mxu0 0.0
    %937 = vmatprep.subr.mxu0 0.0
    %938 = vmatpush1.msra.mxu0 0.0
    %939 = vmatprep.subr.mxu0 0.0
    %940 = vmatpush1.msra.mxu0 0.0
    %941 = vmatprep.subr.mxu0 0.0
    %942 = vmatpush1.msra.mxu0 0.0
    %943 = vmatprep.subr.mxu0 %v202
    %944 = vmatpush1.msra.mxu0 %v201
    %945 = vmatprep.subr.mxu0 %v200
    %946 = vmatpush1.msra.mxu0 %v199
    %947 = vmatprep.subr.mxu0 %v198
    %948 = vmatpush1.msra.mxu0 %v197
    %949 = vmatprep.subr.mxu0 %v196
    %950 = vmatpush1.msra.mxu0 %v195
    %951 = vmatprep.subr.mxu0 %v194
    %952 = vmatpush1.msra.mxu0 %v193
    %953 = vmatprep.subr.mxu0 %v192
    %954 = vmatpush1.msra.mxu0 %v191
    %955 = vmatprep.subr.mxu0 %v190
    %956 = vmatpush1.msra.mxu0 %v189
    %957 = vmatprep.subr.mxu0 %v188
    %958 = vmatpush1.msra.mxu0 %v187
    %959 = vmatprep.subr.mxu0 0.0
    %960 = vmatpush2.msra.mxu0 0.0
    %961 = vmatprep.subr.mxu0 0.0
    %962 = vmatpush2.msra.mxu0 0.0
    %963 = vmatprep.subr.mxu0 0.0
    %964 = vmatpush2.msra.mxu0 0.0
    %965 = vmatprep.subr.mxu0 0.0
    %966 = vmatpush2.msra.mxu0 0.0
    %967 = vmatprep.subr.mxu0 0.0
    %968 = vmatpush2.msra.mxu0 0.0
    %969 = vmatprep.subr.mxu0 0.0
    %970 = vmatpush2.msra.mxu0 0.0
    %971 = vmatprep.subr.mxu0 0.0
    %972 = vmatpush2.msra.mxu0 0.0
    %973 = vmatprep.subr.mxu0 0.0
    %974 = vmatpush2.msra.mxu0 0.0
    %975 = vmatprep.subr.mxu0 0.0
    %976 = vmatpush2.msra.mxu0 0.0
    %977 = vmatprep.subr.mxu0 0.0
    %978 = vmatpush2.msra.mxu0 0.0
    %979 = vmatprep.subr.mxu0 0.0
    %980 = vmatpush2.msra.mxu0 0.0
    %981 = vmatprep.subr.mxu0 0.0
    %982 = vmatpush2.msra.mxu0 0.0
    %983 = vmatprep.subr.mxu0 0.0
    %984 = vmatpush2.msra.mxu0 0.0
    %985 = vmatprep.subr.mxu0 0.0
    %986 = vmatpush2.msra.mxu0 0.0
    %987 = vmatprep.subr.mxu0 0.0
    %988 = vmatpush2.msra.mxu0 0.0
    %989 = vmatprep.subr.mxu0 0.0
    %990 = vmatpush2.msra.mxu0 0.0
    %991 = vmatprep.mubr.f32.mxu0 0.0
    %992 = vmatmul.mubr.f32.gmra.mxu0 %v925
    %v993 = vpop.f32.mrf.mxu0
    %v994 = vadd.f32 0.0, %v993
    %v995 = vpop.f32.mrf.mxu0
    %v996 = vadd.f32 0.0, %v995
    %997 = vdwg.mxu0
    %v1000 = vcombine.low %v994, %v996
    %v1002 = vunpack.c.l.s4 1983009808
    %v1003 = vunpack.c.0.s8 %v1002
    %v1004 = vlaneseq
    %v1005 = vshrl.u32 %v1004, 7
    %v1006 = vsub.s32 %v1003, %v1005
    %v1007 = vrot.slane %v1000, %v1006
    %v1009 = vadd.f32 %v923, %v1007
    %v1010 = vxor.u32 %v1009, 2147483648
    %v1011 = vmul.f32 %v1010, 1.442695
    %v1012 = vpow.pop %v1011
    %v1013 = vadd.f32 %v1012, 1.0
    %v1014 = vrcp.pop %v1013
    %v1015 = vmul.f32 1.0, %v1014
    %1017 = vrot.lane.b32.xlu0 %v1009, 64
    %v1018 = vpop.permute.xlu0 %1017
    %v1019 = vrot.slane %v1018, 2
    %v1021 = vtanh.pop %v1019
    %v1022 = vmul.f32 %v1015, %v913
    %v1023 = vmul.f32 %v1015, %v1021
    %1025 = vrot.lane.b32.xlu0 %v1023, 64
    %v1026 = vpop.permute.xlu0 %1025
    %v1028 = vadd.f32 %v1022, %v1026
    %v1029 = vtanh.pop %v1028
    %v1031 = vrot.slane %v1015, 2
    %1034 = vrot.lane.b32.xlu0 %v1029, 64
    %v1035 = vpop.permute.xlu0 %1034
    %v1037 = vmul.f32 %v1031, %v1035
    %v1038 = vld [vmem:[%s4] sm:$0xff]
    %v1039 = vld [vmem:[%s4 + $0x8] sm:$0xff]
    %v1040 = vld [vmem:[%s4 + $0x10] sm:$0xff]
    %v1041 = vld [vmem:[%s4 + $0x18] sm:$0xff]
    %v1042 = vld [vmem:[%s4 + $0x20] sm:$0xff]
    %v1043 = vld [vmem:[%s4 + $0x28] sm:$0xff]
    %v1044 = vld [vmem:[%s4 + $0x30] sm:$0xff]
    %v1045 = vld [vmem:[%s4 + $0x38] sm:$0xff]
    %s1046 = scalar_lea.vmem %s4, 64
    %v1047 = vld [vmem:[%s1046] sm:$0xff]
    %v1048 = vld [vmem:[%s1046 + $0x8] sm:$0xff]
    %v1049 = vld [vmem:[%s1046 + $0x10] sm:$0xff]
    %v1050 = vld [vmem:[%s1046 + $0x18] sm:$0xff]
    %v1051 = vld [vmem:[%s1046 + $0x20] sm:$0xff]
    %v1052 = vld [vmem:[%s1046 + $0x28] sm:$0xff]
    %v1053 = vld [vmem:[%s1046 + $0x30] sm:$0xff]
    %v1054 = vld [vmem:[%s1046 + $0x38] sm:$0xff]
    %1055 = vmatprep.subr.mxu0 0.0
    %1056 = vmatpush1.msra.mxu0 0.0
    %1057 = vmatprep.subr.mxu0 0.0
    %1058 = vmatpush1.msra.mxu0 0.0
    %1059 = vmatprep.subr.mxu0 0.0
    %1060 = vmatpush1.msra.mxu0 0.0
    %1061 = vmatprep.subr.mxu0 0.0
    %1062 = vmatpush1.msra.mxu0 0.0
    %1063 = vmatprep.subr.mxu0 0.0
    %1064 = vmatpush1.msra.mxu0 0.0
    %1065 = vmatprep.subr.mxu0 0.0
    %1066 = vmatpush1.msra.mxu0 0.0
    %1067 = vmatprep.subr.mxu0 0.0
    %1068 = vmatpush1.msra.mxu0 0.0
    %1069 = vmatprep.subr.mxu0 0.0
    %1070 = vmatpush1.msra.mxu0 0.0
    %1071 = vmatprep.subr.mxu0 0.0
    %1072 = vmatpush1.msra.mxu0 %v1054
    %1073 = vmatprep.subr.mxu0 0.0
    %1074 = vmatpush1.msra.mxu0 %v1053
    %1075 = vmatprep.subr.mxu0 0.0
    %1076 = vmatpush1.msra.mxu0 %v1052
    %1077 = vmatprep.subr.mxu0 0.0
    %1078 = vmatpush1.msra.mxu0 %v1051
    %1079 = vmatprep.subr.mxu0 0.0
    %1080 = vmatpush1.msra.mxu0 %v1050
    %1081 = vmatprep.subr.mxu0 0.0
    %1082 = vmatpush1.msra.mxu0 %v1049
    %1083 = vmatprep.subr.mxu0 0.0
    %1084 = vmatpush1.msra.mxu0 %v1048
    %1085 = vmatprep.subr.mxu0 0.0
    %1086 = vmatpush1.msra.mxu0 %v1047
    %1087 = vmatprep.subr.mxu0 0.0
    %1088 = vmatpush2.msra.mxu0 0.0
    %1089 = vmatprep.subr.mxu0 0.0
    %1090 = vmatpush2.msra.mxu0 0.0
    %1091 = vmatprep.subr.mxu0 0.0
    %1092 = vmatpush2.msra.mxu0 0.0
    %1093 = vmatprep.subr.mxu0 0.0
    %1094 = vmatpush2.msra.mxu0 0.0
    %1095 = vmatprep.subr.mxu0 0.0
    %1096 = vmatpush2.msra.mxu0 0.0
    %1097 = vmatprep.subr.mxu0 0.0
    %1098 = vmatpush2.msra.mxu0 0.0
    %1099 = vmatprep.subr.mxu0 0.0
    %1100 = vmatpush2.msra.mxu0 0.0
    %1101 = vmatprep.subr.mxu0 0.0
    %1102 = vmatpush2.msra.mxu0 0.0
    %1103 = vmatprep.subr.mxu0 0.0
    %1104 = vmatpush2.msra.mxu0 0.0
    %1105 = vmatprep.subr.mxu0 0.0
    %1106 = vmatpush2.msra.mxu0 0.0
    %1107 = vmatprep.subr.mxu0 0.0
    %1108 = vmatpush2.msra.mxu0 0.0
    %1109 = vmatprep.subr.mxu0 0.0
    %1110 = vmatpush2.msra.mxu0 0.0
    %1111 = vmatprep.subr.mxu0 0.0
    %1112 = vmatpush2.msra.mxu0 0.0
    %1113 = vmatprep.subr.mxu0 0.0
    %1114 = vmatpush2.msra.mxu0 0.0
    %1115 = vmatprep.subr.mxu0 0.0
    %1116 = vmatpush2.msra.mxu0 0.0
    %1117 = vmatprep.subr.mxu0 0.0
    %1118 = vmatpush2.msra.mxu0 0.0
    %1119 = vmatprep.mubr.f32.mxu0 0.0
    %1120 = vmatmul.mubr.f32.gmra.mxu0 %v350
    %v1121 = vpop.f32.mrf.mxu0
    %v1122 = vadd.f32 0.0, %v1121
    %v1123 = vpop.f32.mrf.mxu0
    %1124 = vdwg.mxu0
    %1125 = vmatprep.subr.mxu0 0.0
    %1126 = vmatpush1.msra.mxu0 0.0
    %1127 = vmatprep.subr.mxu0 0.0
    %1128 = vmatpush1.msra.mxu0 0.0
    %1129 = vmatprep.subr.mxu0 0.0
    %1130 = vmatpush1.msra.mxu0 0.0
    %1131 = vmatprep.subr.mxu0 0.0
    %1132 = vmatpush1.msra.mxu0 0.0
    %1133 = vmatprep.subr.mxu0 0.0
    %1134 = vmatpush1.msra.mxu0 0.0
    %1135 = vmatprep.subr.mxu0 0.0
    %1136 = vmatpush1.msra.mxu0 0.0
    %1137 = vmatprep.subr.mxu0 0.0
    %1138 = vmatpush1.msra.mxu0 0.0
    %1139 = vmatprep.subr.mxu0 0.0
    %1140 = vmatpush1.msra.mxu0 0.0
    %1141 = vmatprep.subr.mxu0 0.0
    %1142 = vmatpush1.msra.mxu0 %v1045
    %1143 = vmatprep.subr.mxu0 0.0
    %1144 = vmatpush1.msra.mxu0 %v1044
    %1145 = vmatprep.subr.mxu0 0.0
    %1146 = vmatpush1.msra.mxu0 %v1043
    %1147 = vmatprep.subr.mxu0 0.0
    %1148 = vmatpush1.msra.mxu0 %v1042
    %1149 = vmatprep.subr.mxu0 0.0
    %1150 = vmatpush1.msra.mxu0 %v1041
    %1151 = vmatprep.subr.mxu0 0.0
    %1152 = vmatpush1.msra.mxu0 %v1040
    %1153 = vmatprep.subr.mxu0 0.0
    %1154 = vmatpush1.msra.mxu0 %v1039
    %1155 = vmatprep.subr.mxu0 0.0
    %1156 = vmatpush1.msra.mxu0 %v1038
    %1157 = vmatprep.subr.mxu0 0.0
    %1158 = vmatpush2.msra.mxu0 0.0
    %1159 = vmatprep.subr.mxu0 0.0
    %1160 = vmatpush2.msra.mxu0 0.0
    %1161 = vmatprep.subr.mxu0 0.0
    %1162 = vmatpush2.msra.mxu0 0.0
    %1163 = vmatprep.subr.mxu0 0.0
    %1164 = vmatpush2.msra.mxu0 0.0
    %1165 = vmatprep.subr.mxu0 0.0
    %1166 = vmatpush2.msra.mxu0 0.0
    %1167 = vmatprep.subr.mxu0 0.0
    %1168 = vmatpush2.msra.mxu0 0.0
    %1169 = vmatprep.subr.mxu0 0.0
    %1170 = vmatpush2.msra.mxu0 0.0
    %1171 = vmatprep.subr.mxu0 0.0
    %1172 = vmatpush2.msra.mxu0 0.0
    %1173 = vmatprep.subr.mxu0 0.0
    %1174 = vmatpush2.msra.mxu0 0.0
    %1175 = vmatprep.subr.mxu0 0.0
    %1176 = vmatpush2.msra.mxu0 0.0
    %1177 = vmatprep.subr.mxu0 0.0
    %1178 = vmatpush2.msra.mxu0 0.0
    %1179 = vmatprep.subr.mxu0 0.0
    %1180 = vmatpush2.msra.mxu0 0.0
    %1181 = vmatprep.subr.mxu0 0.0
    %1182 = vmatpush2.msra.mxu0 0.0
    %1183 = vmatprep.subr.mxu0 0.0
    %1184 = vmatpush2.msra.mxu0 0.0
    %1185 = vmatprep.subr.mxu0 0.0
    %1186 = vmatpush2.msra.mxu0 0.0
    %1187 = vmatprep.subr.mxu0 0.0
    %1188 = vmatpush2.msra.mxu0 0.0
    %1189 = vmatprep.mubr.f32.mxu0 0.0
    %1190 = vmatmul.mubr.f32.gmra.mxu0 %v235
    %v1191 = vpop.f32.mrf.mxu0
    %v1192 = vadd.f32 %v1122, %v1191
    %v1193 = vpop.f32.mrf.mxu0
    %1194 = vdwg.mxu0
    %s1195 = scalar_lea.vmem %s4, 128
    %v1196 = vld [vmem:[%s1195] sm:$0xff]
    %v1197 = vld [vmem:[%s1195 + $0x8] sm:$0xff]
    %v1198 = vld [vmem:[%s1195 + $0x10] sm:$0xff]
    %v1199 = vld [vmem:[%s1195 + $0x18] sm:$0xff]
    %v1200 = vld [vmem:[%s1195 + $0x20] sm:$0xff]
    %v1201 = vld [vmem:[%s1195 + $0x28] sm:$0xff]
    %v1202 = vld [vmem:[%s1195 + $0x30] sm:$0xff]
    %v1203 = vld [vmem:[%s1195 + $0x38] sm:$0xff]
    %1204 = vmatprep.subr.mxu0 0.0
    %1205 = vmatpush1.msra.mxu0 0.0
    %1206 = vmatprep.subr.mxu0 0.0
    %1207 = vmatpush1.msra.mxu0 0.0
    %1208 = vmatprep.subr.mxu0 0.0
    %1209 = vmatpush1.msra.mxu0 0.0
    %1210 = vmatprep.subr.mxu0 0.0
    %1211 = vmatpush1.msra.mxu0 0.0
    %1212 = vmatprep.subr.mxu0 0.0
    %1213 = vmatpush1.msra.mxu0 0.0
    %1214 = vmatprep.subr.mxu0 0.0
    %1215 = vmatpush1.msra.mxu0 0.0
    %1216 = vmatprep.subr.mxu0 0.0
    %1217 = vmatpush1.msra.mxu0 0.0
    %1218 = vmatprep.subr.mxu0 0.0
    %1219 = vmatpush1.msra.mxu0 0.0
    %1220 = vmatprep.subr.mxu0 0.0
    %1221 = vmatpush1.msra.mxu0 %v1203
    %1222 = vmatprep.subr.mxu0 0.0
    %1223 = vmatpush1.msra.mxu0 %v1202
    %1224 = vmatprep.subr.mxu0 0.0
    %1225 = vmatpush1.msra.mxu0 %v1201
    %1226 = vmatprep.subr.mxu0 0.0
    %1227 = vmatpush1.msra.mxu0 %v1200
    %1228 = vmatprep.subr.mxu0 0.0
    %1229 = vmatpush1.msra.mxu0 %v1199
    %1230 = vmatprep.subr.mxu0 0.0
    %1231 = vmatpush1.msra.mxu0 %v1198
    %1232 = vmatprep.subr.mxu0 0.0
    %1233 = vmatpush1.msra.mxu0 %v1197
    %1234 = vmatprep.subr.mxu0 0.0
    %1235 = vmatpush1.msra.mxu0 %v1196
    %1236 = vmatprep.subr.mxu0 0.0
    %1237 = vmatpush2.msra.mxu0 0.0
    %1238 = vmatprep.subr.mxu0 0.0
    %1239 = vmatpush2.msra.mxu0 0.0
    %1240 = vmatprep.subr.mxu0 0.0
    %1241 = vmatpush2.msra.mxu0 0.0
    %1242 = vmatprep.subr.mxu0 0.0
    %1243 = vmatpush2.msra.mxu0 0.0
    %1244 = vmatprep.subr.mxu0 0.0
    %1245 = vmatpush2.msra.mxu0 0.0
    %1246 = vmatprep.subr.mxu0 0.0
    %1247 = vmatpush2.msra.mxu0 0.0
    %1248 = vmatprep.subr.mxu0 0.0
    %1249 = vmatpush2.msra.mxu0 0.0
    %1250 = vmatprep.subr.mxu0 0.0
    %1251 = vmatpush2.msra.mxu0 0.0
    %1252 = vmatprep.subr.mxu0 0.0
    %1253 = vmatpush2.msra.mxu0 0.0
    %1254 = vmatprep.subr.mxu0 0.0
    %1255 = vmatpush2.msra.mxu0 0.0
    %1256 = vmatprep.subr.mxu0 0.0
    %1257 = vmatpush2.msra.mxu0 0.0
    %1258 = vmatprep.subr.mxu0 0.0
    %1259 = vmatpush2.msra.mxu0 0.0
    %1260 = vmatprep.subr.mxu0 0.0
    %1261 = vmatpush2.msra.mxu0 0.0
    %1262 = vmatprep.subr.mxu0 0.0
    %1263 = vmatpush2.msra.mxu0 0.0
    %1264 = vmatprep.subr.mxu0 0.0
    %1265 = vmatpush2.msra.mxu0 0.0
    %1266 = vmatprep.subr.mxu0 0.0
    %1267 = vmatpush2.msra.mxu0 0.0
    %1268 = vmatprep.mubr.f32.mxu0 0.0
    %1269 = vmatmul.mubr.f32.gmra.mxu0 %v465
    %v1270 = vpop.f32.mrf.mxu0
    %v1271 = vadd.f32 0.0, %v1270
    %v1272 = vpop.f32.mrf.mxu0
    %1273 = vdwg.mxu0
    %v1274 = vadd.f32 %v1192, %v1271
    %s1275 = scalar_lea.vmem %s4, 192
    %v1276 = vld [vmem:[%s1275] sm:$0xff]
    %v1277 = vld [vmem:[%s1275 + $0x8] sm:$0xff]
    %v1278 = vld [vmem:[%s1275 + $0x10] sm:$0xff]
    %v1279 = vld [vmem:[%s1275 + $0x18] sm:$0xff]
    %v1280 = vld [vmem:[%s1275 + $0x20] sm:$0xff]
    %v1281 = vld [vmem:[%s1275 + $0x28] sm:$0xff]
    %v1282 = vld [vmem:[%s1275 + $0x30] sm:$0xff]
    %v1283 = vld [vmem:[%s1275 + $0x38] sm:$0xff]
    %1284 = vmatprep.subr.mxu0 0.0
    %1285 = vmatpush1.msra.mxu0 0.0
    %1286 = vmatprep.subr.mxu0 0.0
    %1287 = vmatpush1.msra.mxu0 0.0
    %1288 = vmatprep.subr.mxu0 0.0
    %1289 = vmatpush1.msra.mxu0 0.0
    %1290 = vmatprep.subr.mxu0 0.0
    %1291 = vmatpush1.msra.mxu0 0.0
    %1292 = vmatprep.subr.mxu0 0.0
    %1293 = vmatpush1.msra.mxu0 0.0
    %1294 = vmatprep.subr.mxu0 0.0
    %1295 = vmatpush1.msra.mxu0 0.0
    %1296 = vmatprep.subr.mxu0 0.0
    %1297 = vmatpush1.msra.mxu0 0.0
    %1298 = vmatprep.subr.mxu0 0.0
    %1299 = vmatpush1.msra.mxu0 0.0
    %1300 = vmatprep.subr.mxu0 0.0
    %1301 = vmatpush1.msra.mxu0 %v1283
    %1302 = vmatprep.subr.mxu0 0.0
    %1303 = vmatpush1.msra.mxu0 %v1282
    %1304 = vmatprep.subr.mxu0 0.0
    %1305 = vmatpush1.msra.mxu0 %v1281
    %1306 = vmatprep.subr.mxu0 0.0
    %1307 = vmatpush1.msra.mxu0 %v1280
    %1308 = vmatprep.subr.mxu0 0.0
    %1309 = vmatpush1.msra.mxu0 %v1279
    %1310 = vmatprep.subr.mxu0 0.0
    %1311 = vmatpush1.msra.mxu0 %v1278
    %1312 = vmatprep.subr.mxu0 0.0
    %1313 = vmatpush1.msra.mxu0 %v1277
    %1314 = vmatprep.subr.mxu0 0.0
    %1315 = vmatpush1.msra.mxu0 %v1276
    %1316 = vmatprep.subr.mxu0 0.0
    %1317 = vmatpush2.msra.mxu0 0.0
    %1318 = vmatprep.subr.mxu0 0.0
    %1319 = vmatpush2.msra.mxu0 0.0
    %1320 = vmatprep.subr.mxu0 0.0
    %1321 = vmatpush2.msra.mxu0 0.0
    %1322 = vmatprep.subr.mxu0 0.0
    %1323 = vmatpush2.msra.mxu0 0.0
    %1324 = vmatprep.subr.mxu0 0.0
    %1325 = vmatpush2.msra.mxu0 0.0
    %1326 = vmatprep.subr.mxu0 0.0
    %1327 = vmatpush2.msra.mxu0 0.0
    %1328 = vmatprep.subr.mxu0 0.0
    %1329 = vmatpush2.msra.mxu0 0.0
    %1330 = vmatprep.subr.mxu0 0.0
    %1331 = vmatpush2.msra.mxu0 0.0
    %1332 = vmatprep.subr.mxu0 0.0
    %1333 = vmatpush2.msra.mxu0 0.0
    %1334 = vmatprep.subr.mxu0 0.0
    %1335 = vmatpush2.msra.mxu0 0.0
    %1336 = vmatprep.subr.mxu0 0.0
    %1337 = vmatpush2.msra.mxu0 0.0
    %1338 = vmatprep.subr.mxu0 0.0
    %1339 = vmatpush2.msra.mxu0 0.0
    %1340 = vmatprep.subr.mxu0 0.0
    %1341 = vmatpush2.msra.mxu0 0.0
    %1342 = vmatprep.subr.mxu0 0.0
    %1343 = vmatpush2.msra.mxu0 0.0
    %1344 = vmatprep.subr.mxu0 0.0
    %1345 = vmatpush2.msra.mxu0 0.0
    %1346 = vmatprep.subr.mxu0 0.0
    %1347 = vmatpush2.msra.mxu0 0.0
    %1348 = vmatprep.mubr.f32.mxu0 0.0
    %1349 = vmatmul.mubr.f32.gmra.mxu0 %v580
    %v1350 = vpop.f32.mrf.mxu0
    %v1351 = vadd.f32 0.0, %v1350
    %v1352 = vpop.f32.mrf.mxu0
    %1353 = vdwg.mxu0
    %v1354 = vadd.f32 %v1274, %v1351
    %s1355 = scalar_lea.vmem %s4, 256
    %v1356 = vld [vmem:[%s1355] sm:$0xff]
    %v1357 = vld [vmem:[%s1355 + $0x8] sm:$0xff]
    %v1358 = vld [vmem:[%s1355 + $0x10] sm:$0xff]
    %v1359 = vld [vmem:[%s1355 + $0x18] sm:$0xff]
    %v1360 = vld [vmem:[%s1355 + $0x20] sm:$0xff]
    %v1361 = vld [vmem:[%s1355 + $0x28] sm:$0xff]
    %v1362 = vld [vmem:[%s1355 + $0x30] sm:$0xff]
    %v1363 = vld [vmem:[%s1355 + $0x38] sm:$0xff]
    %1364 = vmatprep.subr.mxu0 0.0
    %1365 = vmatpush1.msra.mxu0 0.0
    %1366 = vmatprep.subr.mxu0 0.0
    %1367 = vmatpush1.msra.mxu0 0.0
    %1368 = vmatprep.subr.mxu0 0.0
    %1369 = vmatpush1.msra.mxu0 0.0
    %1370 = vmatprep.subr.mxu0 0.0
    %1371 = vmatpush1.msra.mxu0 0.0
    %1372 = vmatprep.subr.mxu0 0.0
    %1373 = vmatpush1.msra.mxu0 0.0
    %1374 = vmatprep.subr.mxu0 0.0
    %1375 = vmatpush1.msra.mxu0 0.0
    %1376 = vmatprep.subr.mxu0 0.0
    %1377 = vmatpush1.msra.mxu0 0.0
    %1378 = vmatprep.subr.mxu0 0.0
    %1379 = vmatpush1.msra.mxu0 0.0
    %1380 = vmatprep.subr.mxu0 0.0
    %1381 = vmatpush1.msra.mxu0 %v1363
    %1382 = vmatprep.subr.mxu0 0.0
    %1383 = vmatpush1.msra.mxu0 %v1362
    %1384 = vmatprep.subr.mxu0 0.0
    %1385 = vmatpush1.msra.mxu0 %v1361
    %1386 = vmatprep.subr.mxu0 0.0
    %1387 = vmatpush1.msra.mxu0 %v1360
    %1388 = vmatprep.subr.mxu0 0.0
    %1389 = vmatpush1.msra.mxu0 %v1359
    %1390 = vmatprep.subr.mxu0 0.0
    %1391 = vmatpush1.msra.mxu0 %v1358
    %1392 = vmatprep.subr.mxu0 0.0
    %1393 = vmatpush1.msra.mxu0 %v1357
    %1394 = vmatprep.subr.mxu0 0.0
    %1395 = vmatpush1.msra.mxu0 %v1356
    %1396 = vmatprep.subr.mxu0 0.0
    %1397 = vmatpush2.msra.mxu0 0.0
    %1398 = vmatprep.subr.mxu0 0.0
    %1399 = vmatpush2.msra.mxu0 0.0
    %1400 = vmatprep.subr.mxu0 0.0
    %1401 = vmatpush2.msra.mxu0 0.0
    %1402 = vmatprep.subr.mxu0 0.0
    %1403 = vmatpush2.msra.mxu0 0.0
    %1404 = vmatprep.subr.mxu0 0.0
    %1405 = vmatpush2.msra.mxu0 0.0
    %1406 = vmatprep.subr.mxu0 0.0
    %1407 = vmatpush2.msra.mxu0 0.0
    %1408 = vmatprep.subr.mxu0 0.0
    %1409 = vmatpush2.msra.mxu0 0.0
    %1410 = vmatprep.subr.mxu0 0.0
    %1411 = vmatpush2.msra.mxu0 0.0
    %1412 = vmatprep.subr.mxu0 0.0
    %1413 = vmatpush2.msra.mxu0 0.0
    %1414 = vmatprep.subr.mxu0 0.0
    %1415 = vmatpush2.msra.mxu0 0.0
    %1416 = vmatprep.subr.mxu0 0.0
    %1417 = vmatpush2.msra.mxu0 0.0
    %1418 = vmatprep.subr.mxu0 0.0
    %1419 = vmatpush2.msra.mxu0 0.0
    %1420 = vmatprep.subr.mxu0 0.0
    %1421 = vmatpush2.msra.mxu0 0.0
    %1422 = vmatprep.subr.mxu0 0.0
    %1423 = vmatpush2.msra.mxu0 0.0
    %1424 = vmatprep.subr.mxu0 0.0
    %1425 = vmatpush2.msra.mxu0 0.0
    %1426 = vmatprep.subr.mxu0 0.0
    %1427 = vmatpush2.msra.mxu0 0.0
    %1428 = vmatprep.mubr.f32.mxu0 0.0
    %1429 = vmatmul.mubr.f32.gmra.mxu0 %v695
    %v1430 = vpop.f32.mrf.mxu0
    %v1431 = vadd.f32 0.0, %v1430
    %v1432 = vpop.f32.mrf.mxu0
    %1433 = vdwg.mxu0
    %v1434 = vadd.f32 %v1354, %v1431
    %s1435 = scalar_lea.vmem %s4, 320
    %v1436 = vld [vmem:[%s1435] sm:$0xff]
    %v1437 = vld [vmem:[%s1435 + $0x8] sm:$0xff]
    %v1438 = vld [vmem:[%s1435 + $0x10] sm:$0xff]
    %v1439 = vld [vmem:[%s1435 + $0x18] sm:$0xff]
    %v1440 = vld [vmem:[%s1435 + $0x20] sm:$0xff]
    %v1441 = vld [vmem:[%s1435 + $0x28] sm:$0xff]
    %v1442 = vld [vmem:[%s1435 + $0x30] sm:$0xff]
    %v1443 = vld [vmem:[%s1435 + $0x38] sm:$0xff]
    %1444 = vmatprep.subr.mxu0 0.0
    %1445 = vmatpush1.msra.mxu0 0.0
    %1446 = vmatprep.subr.mxu0 0.0
    %1447 = vmatpush1.msra.mxu0 0.0
    %1448 = vmatprep.subr.mxu0 0.0
    %1449 = vmatpush1.msra.mxu0 0.0
    %1450 = vmatprep.subr.mxu0 0.0
    %1451 = vmatpush1.msra.mxu0 0.0
    %1452 = vmatprep.subr.mxu0 0.0
    %1453 = vmatpush1.msra.mxu0 0.0
    %1454 = vmatprep.subr.mxu0 0.0
    %1455 = vmatpush1.msra.mxu0 0.0
    %1456 = vmatprep.subr.mxu0 0.0
    %1457 = vmatpush1.msra.mxu0 0.0
    %1458 = vmatprep.subr.mxu0 0.0
    %1459 = vmatpush1.msra.mxu0 0.0
    %1460 = vmatprep.subr.mxu0 0.0
    %1461 = vmatpush1.msra.mxu0 %v1443
    %1462 = vmatprep.subr.mxu0 0.0
    %1463 = vmatpush1.msra.mxu0 %v1442
    %1464 = vmatprep.subr.mxu0 0.0
    %1465 = vmatpush1.msra.mxu0 %v1441
    %1466 = vmatprep.subr.mxu0 0.0
    %1467 = vmatpush1.msra.mxu0 %v1440
    %1468 = vmatprep.subr.mxu0 0.0
    %1469 = vmatpush1.msra.mxu0 %v1439
    %1470 = vmatprep.subr.mxu0 0.0
    %1471 = vmatpush1.msra.mxu0 %v1438
    %1472 = vmatprep.subr.mxu0 0.0
    %1473 = vmatpush1.msra.mxu0 %v1437
    %1474 = vmatprep.subr.mxu0 0.0
    %1475 = vmatpush1.msra.mxu0 %v1436
    %1476 = vmatprep.subr.mxu0 0.0
    %1477 = vmatpush2.msra.mxu0 0.0
    %1478 = vmatprep.subr.mxu0 0.0
    %1479 = vmatpush2.msra.mxu0 0.0
    %1480 = vmatprep.subr.mxu0 0.0
    %1481 = vmatpush2.msra.mxu0 0.0
    %1482 = vmatprep.subr.mxu0 0.0
    %1483 = vmatpush2.msra.mxu0 0.0
    %1484 = vmatprep.subr.mxu0 0.0
    %1485 = vmatpush2.msra.mxu0 0.0
    %1486 = vmatprep.subr.mxu0 0.0
    %1487 = vmatpush2.msra.mxu0 0.0
    %1488 = vmatprep.subr.mxu0 0.0
    %1489 = vmatpush2.msra.mxu0 0.0
    %1490 = vmatprep.subr.mxu0 0.0
    %1491 = vmatpush2.msra.mxu0 0.0
    %1492 = vmatprep.subr.mxu0 0.0
    %1493 = vmatpush2.msra.mxu0 0.0
    %1494 = vmatprep.subr.mxu0 0.0
    %1495 = vmatpush2.msra.mxu0 0.0
    %1496 = vmatprep.subr.mxu0 0.0
    %1497 = vmatpush2.msra.mxu0 0.0
    %1498 = vmatprep.subr.mxu0 0.0
    %1499 = vmatpush2.msra.mxu0 0.0
    %1500 = vmatprep.subr.mxu0 0.0
    %1501 = vmatpush2.msra.mxu0 0.0
    %1502 = vmatprep.subr.mxu0 0.0
    %1503 = vmatpush2.msra.mxu0 0.0
    %1504 = vmatprep.subr.mxu0 0.0
    %1505 = vmatpush2.msra.mxu0 0.0
    %1506 = vmatprep.subr.mxu0 0.0
    %1507 = vmatpush2.msra.mxu0 0.0
    %1508 = vmatprep.mubr.f32.mxu0 0.0
    %1509 = vmatmul.mubr.f32.gmra.mxu0 %v810
    %v1510 = vpop.f32.mrf.mxu0
    %v1511 = vadd.f32 0.0, %v1510
    %v1512 = vpop.f32.mrf.mxu0
    %1513 = vdwg.mxu0
    %v1514 = vadd.f32 %v1434, %v1511
    %s1515 = scalar_lea.vmem %s4, 384
    %v1516 = vld [vmem:[%s1515] sm:$0xff]
    %v1517 = vld [vmem:[%s1515 + $0x8] sm:$0xff]
    %v1518 = vld [vmem:[%s1515 + $0x10] sm:$0xff]
    %v1519 = vld [vmem:[%s1515 + $0x18] sm:$0xff]
    %v1520 = vld [vmem:[%s1515 + $0x20] sm:$0xff]
    %v1521 = vld [vmem:[%s1515 + $0x28] sm:$0xff]
    %v1522 = vld [vmem:[%s1515 + $0x30] sm:$0xff]
    %v1523 = vld [vmem:[%s1515 + $0x38] sm:$0xff]
    %1524 = vmatprep.subr.mxu0 0.0
    %1525 = vmatpush1.msra.mxu0 0.0
    %1526 = vmatprep.subr.mxu0 0.0
    %1527 = vmatpush1.msra.mxu0 0.0
    %1528 = vmatprep.subr.mxu0 0.0
    %1529 = vmatpush1.msra.mxu0 0.0
    %1530 = vmatprep.subr.mxu0 0.0
    %1531 = vmatpush1.msra.mxu0 0.0
    %1532 = vmatprep.subr.mxu0 0.0
    %1533 = vmatpush1.msra.mxu0 0.0
    %1534 = vmatprep.subr.mxu0 0.0
    %1535 = vmatpush1.msra.mxu0 0.0
    %1536 = vmatprep.subr.mxu0 0.0
    %1537 = vmatpush1.msra.mxu0 0.0
    %1538 = vmatprep.subr.mxu0 0.0
    %1539 = vmatpush1.msra.mxu0 0.0
    %1540 = vmatprep.subr.mxu0 0.0
    %1541 = vmatpush1.msra.mxu0 %v1523
    %1542 = vmatprep.subr.mxu0 0.0
    %1543 = vmatpush1.msra.mxu0 %v1522
    %1544 = vmatprep.subr.mxu0 0.0
    %1545 = vmatpush1.msra.mxu0 %v1521
    %1546 = vmatprep.subr.mxu0 0.0
    %1547 = vmatpush1.msra.mxu0 %v1520
    %1548 = vmatprep.subr.mxu0 0.0
    %1549 = vmatpush1.msra.mxu0 %v1519
    %1550 = vmatprep.subr.mxu0 0.0
    %1551 = vmatpush1.msra.mxu0 %v1518
    %1552 = vmatprep.subr.mxu0 0.0
    %1553 = vmatpush1.msra.mxu0 %v1517
    %1554 = vmatprep.subr.mxu0 0.0
    %1555 = vmatpush1.msra.mxu0 %v1516
    %1556 = vmatprep.subr.mxu0 0.0
    %1557 = vmatpush2.msra.mxu0 0.0
    %1558 = vmatprep.subr.mxu0 0.0
    %1559 = vmatpush2.msra.mxu0 0.0
    %1560 = vmatprep.subr.mxu0 0.0
    %1561 = vmatpush2.msra.mxu0 0.0
    %1562 = vmatprep.subr.mxu0 0.0
    %1563 = vmatpush2.msra.mxu0 0.0
    %1564 = vmatprep.subr.mxu0 0.0
    %1565 = vmatpush2.msra.mxu0 0.0
    %1566 = vmatprep.subr.mxu0 0.0
    %1567 = vmatpush2.msra.mxu0 0.0
    %1568 = vmatprep.subr.mxu0 0.0
    %1569 = vmatpush2.msra.mxu0 0.0
    %1570 = vmatprep.subr.mxu0 0.0
    %1571 = vmatpush2.msra.mxu0 0.0
    %1572 = vmatprep.subr.mxu0 0.0
    %1573 = vmatpush2.msra.mxu0 0.0
    %1574 = vmatprep.subr.mxu0 0.0
    %1575 = vmatpush2.msra.mxu0 0.0
    %1576 = vmatprep.subr.mxu0 0.0
    %1577 = vmatpush2.msra.mxu0 0.0
    %1578 = vmatprep.subr.mxu0 0.0
    %1579 = vmatpush2.msra.mxu0 0.0
    %1580 = vmatprep.subr.mxu0 0.0
    %1581 = vmatpush2.msra.mxu0 0.0
    %1582 = vmatprep.subr.mxu0 0.0
    %1583 = vmatpush2.msra.mxu0 0.0
    %1584 = vmatprep.subr.mxu0 0.0
    %1585 = vmatpush2.msra.mxu0 0.0
    %1586 = vmatprep.subr.mxu0 0.0
    %1587 = vmatpush2.msra.mxu0 0.0
    %1588 = vmatprep.mubr.f32.mxu0 0.0
    %1589 = vmatmul.mubr.f32.gmra.mxu0 %v925
    %v1590 = vpop.f32.mrf.mxu0
    %v1591 = vadd.f32 0.0, %v1590
    %v1592 = vpop.f32.mrf.mxu0
    %1593 = vdwg.mxu0
    %v1594 = vadd.f32 %v1514, %v1591
    %s1595 = scalar_lea.vmem %s4, 448
    %v1596 = vld [vmem:[%s1595] sm:$0xff]
    %v1597 = vld [vmem:[%s1595 + $0x8] sm:$0xff]
    %v1598 = vld [vmem:[%s1595 + $0x10] sm:$0xff]
    %v1599 = vld [vmem:[%s1595 + $0x18] sm:$0xff]
    %v1600 = vld [vmem:[%s1595 + $0x20] sm:$0xff]
    %v1601 = vld [vmem:[%s1595 + $0x28] sm:$0xff]
    %v1602 = vld [vmem:[%s1595 + $0x30] sm:$0xff]
    %v1603 = vld [vmem:[%s1595 + $0x38] sm:$0xff]
    %v1605 = vsel %vm233, %v1037, 0
    %1607 = vmatprep.subr.mxu0 0.0
    %1608 = vmatpush1.msra.mxu0 0.0
    %1609 = vmatprep.subr.mxu0 0.0
    %1610 = vmatpush1.msra.mxu0 0.0
    %1611 = vmatprep.subr.mxu0 0.0
    %1612 = vmatpush1.msra.mxu0 0.0
    %1613 = vmatprep.subr.mxu0 0.0
    %1614 = vmatpush1.msra.mxu0 0.0
    %1615 = vmatprep.subr.mxu0 0.0
    %1616 = vmatpush1.msra.mxu0 0.0
    %1617 = vmatprep.subr.mxu0 0.0
    %1618 = vmatpush1.msra.mxu0 0.0
    %1619 = vmatprep.subr.mxu0 0.0
    %1620 = vmatpush1.msra.mxu0 0.0
    %1621 = vmatprep.subr.mxu0 0.0
    %1622 = vmatpush1.msra.mxu0 0.0
    %1623 = vmatprep.subr.mxu0 0.0
    %1624 = vmatpush1.msra.mxu0 %v1603
    %1625 = vmatprep.subr.mxu0 0.0
    %1626 = vmatpush1.msra.mxu0 %v1602
    %1627 = vmatprep.subr.mxu0 0.0
    %1628 = vmatpush1.msra.mxu0 %v1601
    %1629 = vmatprep.subr.mxu0 0.0
    %1630 = vmatpush1.msra.mxu0 %v1600
    %1631 = vmatprep.subr.mxu0 0.0
    %1632 = vmatpush1.msra.mxu0 %v1599
    %1633 = vmatprep.subr.mxu0 0.0
    %1634 = vmatpush1.msra.mxu0 %v1598
    %1635 = vmatprep.subr.mxu0 0.0
    %1636 = vmatpush1.msra.mxu0 %v1597
    %1637 = vmatprep.subr.mxu0 0.0
    %1638 = vmatpush1.msra.mxu0 %v1596
    %1639 = vmatprep.subr.mxu0 0.0
    %1640 = vmatpush2.msra.mxu0 0.0
    %1641 = vmatprep.subr.mxu0 0.0
    %1642 = vmatpush2.msra.mxu0 0.0
    %1643 = vmatprep.subr.mxu0 0.0
    %1644 = vmatpush2.msra.mxu0 0.0
    %1645 = vmatprep.subr.mxu0 0.0
    %1646 = vmatpush2.msra.mxu0 0.0
    %1647 = vmatprep.subr.mxu0 0.0
    %1648 = vmatpush2.msra.mxu0 0.0
    %1649 = vmatprep.subr.mxu0 0.0
    %1650 = vmatpush2.msra.mxu0 0.0
    %1651 = vmatprep.subr.mxu0 0.0
    %1652 = vmatpush2.msra.mxu0 0.0
    %1653 = vmatprep.subr.mxu0 0.0
    %1654 = vmatpush2.msra.mxu0 0.0
    %1655 = vmatprep.subr.mxu0 0.0
    %1656 = vmatpush2.msra.mxu0 0.0
    %1657 = vmatprep.subr.mxu0 0.0
    %1658 = vmatpush2.msra.mxu0 0.0
    %1659 = vmatprep.subr.mxu0 0.0
    %1660 = vmatpush2.msra.mxu0 0.0
    %1661 = vmatprep.subr.mxu0 0.0
    %1662 = vmatpush2.msra.mxu0 0.0
    %1663 = vmatprep.subr.mxu0 0.0
    %1664 = vmatpush2.msra.mxu0 0.0
    %1665 = vmatprep.subr.mxu0 0.0
    %1666 = vmatpush2.msra.mxu0 0.0
    %1667 = vmatprep.subr.mxu0 0.0
    %1668 = vmatpush2.msra.mxu0 0.0
    %1669 = vmatprep.subr.mxu0 0.0
    %1670 = vmatpush2.msra.mxu0 0.0
    %1671 = vmatprep.mubr.f32.mxu0 0.0
    %1672 = vmatmul.mubr.f32.gmra.mxu0 %v1605
    %v1673 = vpop.f32.mrf.mxu0
    %v1674 = vadd.f32 0.0, %v1673
    %v1675 = vpop.f32.mrf.mxu0
    %1676 = vdwg.mxu0
    %v1677 = vadd.f32 %v1594, %v1674
    %v1678 = vld [vmem:[%s5] sm:$0x1]
    %v1680 = vlaneseq
    %v1681 = vshrl.u32 %v1680, 7
    %v1682 = vsub.s32 0, %v1681
    %v1683 = vrot.slane %v1678, %v1682
    %v1685 = vadd.f32 %v1677, %v1683
    %vm1686 = vcmask 33792
    %1687 = vst.msk [vmem:[#allocation3] sm:$0x3] %vm1686, %v1685
    // Predicated region
    $region26: #{tpu_custom_call.1} parent=1 // pred_check
      _
    $region27: #{tpu_custom_call.1} parent=1 // pred_check_branch
      %1689 = sbr.rel (0) target = $region29
    $region28: #{tpu_custom_call.1} parent=1 // pred_region
      %s1691 = ssub.s32 32, 32
      %1692 = vsyncadd [#allocation4], %s1691
      %s1694 = sshll.u32 [#allocation3], 4
      %s1695 = int_to_ptr.vmem [resolvable:$true] %s1694
      %1697 = dma.vmem_to_hbm [thread:$0]  %s1695, 32, %s6, [#allocation4]
    $region29: #{tpu_custom_call.1} parent=1 // pred_fallthru
      _
    // Predicated region
    $region30: #{tpu_custom_call.1} parent=1 // pred_check
      _
    $region31: #{tpu_custom_call.1} parent=1 // pred_check_branch
      %1699 = sbr.rel (0) target = $region33
    $region32: #{tpu_custom_call.1} parent=1 // pred_region
      %1700 = dma.done [#allocation4], 32
    $region33: #{tpu_custom_call.1} parent=1 // pred_fallthru
      _
    %1701 = vsyncpa [#allocation4], 1

</llo_original>
